<compile_context>
chip_gen: v6e
topology: v6e:2x2x1
jax: 0.10.0
libtpu: 0.0.40
codegen_flags: <defaults>
</compile_context>

<pallas_src>
import functools

import jax
import jax.numpy as jnp
from jax.experimental import pallas as pl
from jax.experimental.pallas import tpu as pltpu

BATCH = 2
SEQ_LEN = 8
EMBED = 32       # embedding_size
FEATURES = 16    # n_features == LSTM hidden size
NUM_LAYERS = 2


def _sigmoid(x):
    return 1.0 / (1.0 + jnp.exp(-x))


# ----------------------------------------------------------------------------
# Fused decoder-LSTM kernel.
# refs (all full-array VMEM blocks):
#   x_ref    : (B, E)     the `hidden` vector fed at every timestep
#   wih0_ref : (E, 4H)    layer-0 input weights (transposed), gate order i,f,g,o
#   whh0_ref : (H, 4H)    layer-0 recurrent weights (transposed)
#   b0_ref   : (1, 4H)    layer-0 bias (b_ih + b_hh)
#   per layer l >= 1:
#     wcat_ref : (2H, 4H) [W_ih_l.T ; W_hh_l.T] stacked on the contraction dim
#     b_ref    : (1, 4H)  b_ih_l + b_hh_l
#   out_ref  : (B, S, H)
# ----------------------------------------------------------------------------
def _decoder_lstm_kernel(*refs, seq_len, num_layers, hidden_size):
    H = hidden_size
    x_ref, wih0_ref, whh0_ref, b0_ref = refs[0], refs[1], refs[2], refs[3]
    layer_refs = refs[4:4 + 2 * (num_layers - 1)]
    out_ref = refs[-1]

    B = x_ref.shape[0]
    f32 = jnp.float32

    # Layer-0 input projection is identical for every timestep (the module
    # repeats the same `hidden` vector seq_len times) -> compute it once.
    x = x_ref[...]
    xproj0 = jnp.dot(x, wih0_ref[...], preferred_element_type=f32) + b0_ref[...]
    whh0 = whh0_ref[...]
    wcats = [layer_refs[2 * i][...] for i in range(num_layers - 1)]
    bls = [layer_refs[2 * i + 1][...] for i in range(num_layers - 1)]

    def cell(gates, c_prev):
        i = _sigmoid(gates[:, 0 * H:1 * H])
        f = _sigmoid(gates[:, 1 * H:2 * H])
        g = jnp.tanh(gates[:, 2 * H:3 * H])
        o = _sigmoid(gates[:, 3 * H:4 * H])
        c_new = f * c_prev + i * g
        h_new = o * jnp.tanh(c_new)
        return h_new, c_new

    # Initial hidden/cell states are zeros (matches torch.zeros(...) in forward).
    h = [jnp.zeros((B, H), f32) for _ in range(num_layers)]
    c = [jnp.zeros((B, H), f32) for _ in range(num_layers)]

    # seq_len is small & static -> fully unrolled Python loop (LLO visibility).
    # TODO(synk): for long sequences switch to lax.fori_loop + VMEM state scratch.
    for t in range(seq_len):
        # layer 0: one (B,H)x(H,4H) MXU matmul per step.
        gates0 = xproj0 + jnp.dot(h[0], whh0, preferred_element_type=f32)
        h[0], c[0] = cell(gates0, c[0])
        below = h[0]
        # layers >= 1: single fused [x_below, h_prev] @ W_cat matmul per step.
        for l in range(1, num_layers):
            inp = jnp.concatenate([below, h[l]], axis=1)            # (B, 2H)
            gates = (jnp.dot(inp, wcats[l - 1], preferred_element_type=f32)
                     + bls[l - 1])
            h[l], c[l] = cell(gates, c[l])
            below = h[l]
        out_ref[:, t:t + 1, :] = below[:, None, :].astype(out_ref.dtype)


def _full_spec(shape):
    n = len(shape)
    return pl.BlockSpec(shape, lambda i, n=n: (0,) * n)


def decoder_forward_pallas(hidden, wih0_t, whh0_t, b0, wcats, bls, *, seq_len):
    """hidden: (B, E). Returns (B, seq_len, H) == nn.LSTM(batch_first=True) output."""
    B = hidden.shape[0]
    H = whh0_t.shape[0]
    num_layers = 1 + len(wcats)
    args = [hidden, wih0_t, whh0_t, b0]
    for w, b in zip(wcats, bls):
        args += [w, b]
    kern = functools.partial(_decoder_lstm_kernel, seq_len=seq_len,
                             num_layers=num_layers, hidden_size=H)
    return pl.pallas_call(
        kern,
        out_shape=jax.ShapeDtypeStruct((B, seq_len, H), jnp.float32),
        grid=(1,),
        in_specs=[_full_spec(a.shape) for a in args],
        out_specs=_full_spec((B, seq_len, H)),
        compiler_params=pltpu.CompilerParams(
            dimension_semantics=("arbitrary",),
            vmem_limit_bytes=4 * 1024 * 1024),
    )(*args)


# ----------------------------------------------------------------------------
# Synthetic parameters in PyTorch nn.LSTM layout, plus one-time packing into
# the kernel layout (transposed weights, summed biases, concatenated W_cat).
# ----------------------------------------------------------------------------
def init_pt_params(key, embed, hidden, num_layers):
    """PyTorch layout per layer: W_ih (4H, in), W_hh (4H, H), b_ih (4H,), b_hh (4H,)."""
    params = []
    bound = 1.0 / float(jnp.sqrt(jnp.float32(hidden)))
    for l in range(num_layers):
        in_size = embed if l == 0 else hidden
        key, k1, k2, k3, k4 = jax.random.split(key, 5)
        params.append(dict(
            w_ih=jax.random.uniform(k1, (4 * hidden, in_size), jnp.float32, -bound, bound),
            w_hh=jax.random.uniform(k2, (4 * hidden, hidden), jnp.float32, -bound, bound),
            b_ih=jax.random.uniform(k3, (4 * hidden,), jnp.float32, -bound, bound),
            b_hh=jax.random.uniform(k4, (4 * hidden,), jnp.float32, -bound, bound),
        ))
    return params


def pack_params(pt_params):
    l0 = pt_params[0]
    wih0_t = l0["w_ih"].T                                   # (E, 4H)
    whh0_t = l0["w_hh"].T                                   # (H, 4H)
    b0 = (l0["b_ih"] + l0["b_hh"])[None, :]                 # (1, 4H)
    wcats, bls = [], []
    for p in pt_params[1:]:
        wcats.append(jnp.concatenate([p["w_ih"].T, p["w_hh"].T], axis=0))  # (2H, 4H)
        bls.append((p["b_ih"] + p["b_hh"])[None, :])
    return wih0_t, whh0_t, b0, tuple(wcats), tuple(bls)


# ----------------------------------------------------------------------------
# Pure-JAX reference (mirrors PyTorch LSTM semantics exactly) for verification.
# ----------------------------------------------------------------------------
def decoder_reference(pt_params, hidden, seq_len):
    H = pt_params[0]["w_hh"].shape[1]
    num_layers = len(pt_params)
    B = hidden.shape[0]
    with jax.default_matmul_precision("highest"):
        h = [jnp.zeros((B, H), jnp.float32) for _ in range(num_layers)]
        c = [jnp.zeros((B, H), jnp.float32) for _ in range(num_layers)]
        outs = []
        for _ in range(seq_len):
            xt = hidden                       # repeated input at every timestep
            for l, p in enumerate(pt_params):
                gates = (xt @ p["w_ih"].T + p["b_ih"]
                         + h[l] @ p["w_hh"].T + p["b_hh"])
                i = _sigmoid(gates[:, 0 * H:1 * H])
                f = _sigmoid(gates[:, 1 * H:2 * H])
                g = jnp.tanh(gates[:, 2 * H:3 * H])
                o = _sigmoid(gates[:, 3 * H:4 * H])
                c[l] = f * c[l] + i * g
                h[l] = o * jnp.tanh(c[l])
                xt = h[l]
            outs.append(xt)
        return jnp.stack(outs, axis=1)


if __name__ == "__main__":
    key = jax.random.PRNGKey(0)
    k_params, k_hidden = jax.random.split(key)

    pt_params = init_pt_params(k_params, EMBED, FEATURES, NUM_LAYERS)
    wih0_t, whh0_t, b0, wcats, bls = pack_params(pt_params)

    hidden = jax.random.normal(k_hidden, (BATCH, EMBED), jnp.float32)

    fwd = jax.jit(functools.partial(decoder_forward_pallas, seq_len=SEQ_LEN))
    out = fwd(hidden, wih0_t, whh0_t, b0, wcats, bls)
    out = jax.block_until_ready(out)

    assert out.shape == (BATCH, SEQ_LEN, FEATURES), out.shape
    assert bool(jnp.all(jnp.isfinite(out)))

    ref = decoder_reference(pt_params, hidden, SEQ_LEN)
    assert bool(jnp.allclose(out, ref, atol=2e-3, rtol=2e-3)), \
        float(jnp.max(jnp.abs(out - ref)))

    print("KERNEL_OK")
</pallas_src>

<mosaic_0001>
module attributes {stable_mosaic.version = 11 : i64} {
  func.func @_decoder_lstm_kernel(%arg0: i32, %arg1: memref<2x32xf32, #tpu.memory_space<vmem>>, %arg2: memref<32x64xf32, #tpu.memory_space<vmem>>, %arg3: memref<16x64xf32, #tpu.memory_space<vmem>>, %arg4: memref<1x64xf32, #tpu.memory_space<vmem>>, %arg5: memref<32x64xf32, #tpu.memory_space<vmem>>, %arg6: memref<1x64xf32, #tpu.memory_space<vmem>>, %arg7: memref<2x8x16xf32, #tpu.memory_space<vmem>>) attributes {dimension_semantics = [#tpu.dimension_semantics<arbitrary>], iteration_bounds = array<i64: 1>, scalar_prefetch = 0 : i64, scratch_operands = 0 : i64, tpu.core_type = #tpu.core_type<tc>, window_params = [{pipeline_mode = #tpu.pipeline_mode<synchronous>, transform_indices = @transform_0, window_bounds = array<i64: 2, 32>}, {pipeline_mode = #tpu.pipeline_mode<synchronous>, transform_indices = @transform_1, window_bounds = array<i64: 32, 64>}, {pipeline_mode = #tpu.pipeline_mode<synchronous>, transform_indices = @transform_2, window_bounds = array<i64: 16, 64>}, {pipeline_mode = #tpu.pipeline_mode<synchronous>, transform_indices = @transform_3, window_bounds = array<i64: 1, 64>}, {pipeline_mode = #tpu.pipeline_mode<synchronous>, transform_indices = @transform_4, window_bounds = array<i64: 32, 64>}, {pipeline_mode = #tpu.pipeline_mode<synchronous>, transform_indices = @transform_5, window_bounds = array<i64: 1, 64>}, {pipeline_mode = #tpu.pipeline_mode<synchronous>, transform_indices = @transform_6, window_bounds = array<i64: 2, 8, 16>}]} {
    %c0 = arith.constant 0 : index
    %c0_0 = arith.constant 0 : index
    %0 = vector.load %arg1[%c0, %c0_0] : memref<2x32xf32, #tpu.memory_space<vmem>>, vector<2x32xf32>
    %c0_1 = arith.constant 0 : index
    %c0_2 = arith.constant 0 : index
    %1 = vector.load %arg2[%c0_1, %c0_2] : memref<32x64xf32, #tpu.memory_space<vmem>>, vector<32x64xf32>
    %cst = arith.constant dense<0.000000e+00> : vector<2x64xf32>
    %2 = tpu.matmul %0, %1, %cst {dimension_numbers = #tpu.dot_dimension_numbers<[1], [0], [0], [1], [0, 0, 1, 1], [], []>} : vector<2x32xf32>, vector<32x64xf32>, vector<2x64xf32> -> vector<2x64xf32>
    %c0_3 = arith.constant 0 : index
    %c0_4 = arith.constant 0 : index
    %3 = vector.load %arg4[%c0_3, %c0_4] : memref<1x64xf32, #tpu.memory_space<vmem>>, vector<1x64xf32>
    %4 = vector.broadcast %3 : vector<1x64xf32> to vector<2x64xf32>
    %5 = arith.addf %2, %4 : vector<2x64xf32>
    %c0_5 = arith.constant 0 : index
    %c0_6 = arith.constant 0 : index
    %6 = vector.load %arg3[%c0_5, %c0_6] : memref<16x64xf32, #tpu.memory_space<vmem>>, vector<16x64xf32>
    %c0_7 = arith.constant 0 : index
    %c0_8 = arith.constant 0 : index
    %7 = vector.load %arg5[%c0_7, %c0_8] : memref<32x64xf32, #tpu.memory_space<vmem>>, vector<32x64xf32>
    %c0_9 = arith.constant 0 : index
    %c0_10 = arith.constant 0 : index
    %8 = vector.load %arg6[%c0_9, %c0_10] : memref<1x64xf32, #tpu.memory_space<vmem>>, vector<1x64xf32>
    %cst_11 = arith.constant 0.000000e+00 : f32
    %9 = vector.broadcast %cst_11 : f32 to vector<2x16xf32>
    %cst_12 = arith.constant 0.000000e+00 : f32
    %10 = vector.broadcast %cst_12 : f32 to vector<2x16xf32>
    %cst_13 = arith.constant 0.000000e+00 : f32
    %11 = vector.broadcast %cst_13 : f32 to vector<2x16xf32>
    %cst_14 = arith.constant 0.000000e+00 : f32
    %12 = vector.broadcast %cst_14 : f32 to vector<2x16xf32>
    %cst_15 = arith.constant dense<0.000000e+00> : vector<2x64xf32>
    %13 = tpu.matmul %9, %6, %cst_15 {dimension_numbers = #tpu.dot_dimension_numbers<[1], [0], [0], [1], [0, 0, 1, 1], [], []>} : vector<2x16xf32>, vector<16x64xf32>, vector<2x64xf32> -> vector<2x64xf32>
    %14 = arith.addf %5, %13 : vector<2x64xf32>
    %15 = vector.extract_strided_slice %14 {offsets = [0, 0], sizes = [2, 16], strides = [1, 1]} : vector<2x64xf32> to vector<2x16xf32>
    %cst_16 = arith.constant 0.000000e+00 : f32
    %16 = vector.broadcast %cst_16 : f32 to vector<2x16xf32>
    %17 = arith.subf %16, %15 : vector<2x16xf32>
    %18 = math.exp %17 : vector<2x16xf32>
    %cst_17 = arith.constant 1.000000e+00 : f32
    %19 = vector.broadcast %cst_17 : f32 to vector<2x16xf32>
    %20 = arith.addf %19, %18 : vector<2x16xf32>
    %cst_18 = arith.constant 1.000000e+00 : f32
    %21 = vector.broadcast %cst_18 : f32 to vector<2x16xf32>
    %22 = arith.divf %21, %20 : vector<2x16xf32>
    %23 = vector.extract_strided_slice %14 {offsets = [0, 16], sizes = [2, 16], strides = [1, 1]} : vector<2x64xf32> to vector<2x16xf32>
    %cst_19 = arith.constant 0.000000e+00 : f32
    %24 = vector.broadcast %cst_19 : f32 to vector<2x16xf32>
    %25 = arith.subf %24, %23 : vector<2x16xf32>
    %26 = math.exp %25 : vector<2x16xf32>
    %cst_20 = arith.constant 1.000000e+00 : f32
    %27 = vector.broadcast %cst_20 : f32 to vector<2x16xf32>
    %28 = arith.addf %27, %26 : vector<2x16xf32>
    %cst_21 = arith.constant 1.000000e+00 : f32
    %29 = vector.broadcast %cst_21 : f32 to vector<2x16xf32>
    %30 = arith.divf %29, %28 : vector<2x16xf32>
    %31 = vector.extract_strided_slice %14 {offsets = [0, 32], sizes = [2, 16], strides = [1, 1]} : vector<2x64xf32> to vector<2x16xf32>
    %32 = math.tanh %31 : vector<2x16xf32>
    %33 = vector.extract_strided_slice %14 {offsets = [0, 48], sizes = [2, 16], strides = [1, 1]} : vector<2x64xf32> to vector<2x16xf32>
    %cst_22 = arith.constant 0.000000e+00 : f32
    %34 = vector.broadcast %cst_22 : f32 to vector<2x16xf32>
    %35 = arith.subf %34, %33 : vector<2x16xf32>
    %36 = math.exp %35 : vector<2x16xf32>
    %cst_23 = arith.constant 1.000000e+00 : f32
    %37 = vector.broadcast %cst_23 : f32 to vector<2x16xf32>
    %38 = arith.addf %37, %36 : vector<2x16xf32>
    %cst_24 = arith.constant 1.000000e+00 : f32
    %39 = vector.broadcast %cst_24 : f32 to vector<2x16xf32>
    %40 = arith.divf %39, %38 : vector<2x16xf32>
    %41 = arith.mulf %30, %11 : vector<2x16xf32>
    %42 = arith.mulf %22, %32 : vector<2x16xf32>
    %43 = arith.addf %41, %42 : vector<2x16xf32>
    %44 = math.tanh %43 : vector<2x16xf32>
    %45 = arith.mulf %40, %44 : vector<2x16xf32>
    %46 = tpu.concatenate %45, %10 in 1 : vector<2x16xf32>, vector<2x16xf32> -> vector<2x32xf32>
    %cst_25 = arith.constant dense<0.000000e+00> : vector<2x64xf32>
    %47 = tpu.matmul %46, %7, %cst_25 {dimension_numbers = #tpu.dot_dimension_numbers<[1], [0], [0], [1], [0, 0, 1, 1], [], []>} : vector<2x32xf32>, vector<32x64xf32>, vector<2x64xf32> -> vector<2x64xf32>
    %48 = vector.broadcast %8 : vector<1x64xf32> to vector<2x64xf32>
    %49 = arith.addf %47, %48 : vector<2x64xf32>
    %50 = vector.extract_strided_slice %49 {offsets = [0, 0], sizes = [2, 16], strides = [1, 1]} : vector<2x64xf32> to vector<2x16xf32>
    %cst_26 = arith.constant 0.000000e+00 : f32
    %51 = vector.broadcast %cst_26 : f32 to vector<2x16xf32>
    %52 = arith.subf %51, %50 : vector<2x16xf32>
    %53 = math.exp %52 : vector<2x16xf32>
    %cst_27 = arith.constant 1.000000e+00 : f32
    %54 = vector.broadcast %cst_27 : f32 to vector<2x16xf32>
    %55 = arith.addf %54, %53 : vector<2x16xf32>
    %cst_28 = arith.constant 1.000000e+00 : f32
    %56 = vector.broadcast %cst_28 : f32 to vector<2x16xf32>
    %57 = arith.divf %56, %55 : vector<2x16xf32>
    %58 = vector.extract_strided_slice %49 {offsets = [0, 16], sizes = [2, 16], strides = [1, 1]} : vector<2x64xf32> to vector<2x16xf32>
    %cst_29 = arith.constant 0.000000e+00 : f32
    %59 = vector.broadcast %cst_29 : f32 to vector<2x16xf32>
    %60 = arith.subf %59, %58 : vector<2x16xf32>
    %61 = math.exp %60 : vector<2x16xf32>
    %cst_30 = arith.constant 1.000000e+00 : f32
    %62 = vector.broadcast %cst_30 : f32 to vector<2x16xf32>
    %63 = arith.addf %62, %61 : vector<2x16xf32>
    %cst_31 = arith.constant 1.000000e+00 : f32
    %64 = vector.broadcast %cst_31 : f32 to vector<2x16xf32>
    %65 = arith.divf %64, %63 : vector<2x16xf32>
    %66 = vector.extract_strided_slice %49 {offsets = [0, 32], sizes = [2, 16], strides = [1, 1]} : vector<2x64xf32> to vector<2x16xf32>
    %67 = math.tanh %66 : vector<2x16xf32>
    %68 = vector.extract_strided_slice %49 {offsets = [0, 48], sizes = [2, 16], strides = [1, 1]} : vector<2x64xf32> to vector<2x16xf32>
    %cst_32 = arith.constant 0.000000e+00 : f32
    %69 = vector.broadcast %cst_32 : f32 to vector<2x16xf32>
    %70 = arith.subf %69, %68 : vector<2x16xf32>
    %71 = math.exp %70 : vector<2x16xf32>
    %cst_33 = arith.constant 1.000000e+00 : f32
    %72 = vector.broadcast %cst_33 : f32 to vector<2x16xf32>
    %73 = arith.addf %72, %71 : vector<2x16xf32>
    %cst_34 = arith.constant 1.000000e+00 : f32
    %74 = vector.broadcast %cst_34 : f32 to vector<2x16xf32>
    %75 = arith.divf %74, %73 : vector<2x16xf32>
    %76 = arith.mulf %65, %12 : vector<2x16xf32>
    %77 = arith.mulf %57, %67 : vector<2x16xf32>
    %78 = arith.addf %76, %77 : vector<2x16xf32>
    %79 = math.tanh %78 : vector<2x16xf32>
    %80 = arith.mulf %75, %79 : vector<2x16xf32>
    %81 = vector.shape_cast %80 : vector<2x16xf32> to vector<2x1x16xf32>
    %c0_35 = arith.constant 0 : index
    %c0_36 = arith.constant 0 : index
    %c0_37 = arith.constant 0 : index
    %82 = vector.load %arg7[%c0_35, %c0_36, %c0_37] : memref<2x8x16xf32, #tpu.memory_space<vmem>>, vector<2x1x16xf32>
    tpu.vector_store %arg7[%c0_35, %c0_36, %c0_37], %81 {strides = array<i32>} : memref<2x8x16xf32, #tpu.memory_space<vmem>>, vector<2x1x16xf32>,
    %cst_38 = arith.constant dense<0.000000e+00> : vector<2x64xf32>
    %83 = tpu.matmul %45, %6, %cst_38 {dimension_numbers = #tpu.dot_dimension_numbers<[1], [0], [0], [1], [0, 0, 1, 1], [], []>} : vector<2x16xf32>, vector<16x64xf32>, vector<2x64xf32> -> vector<2x64xf32>
    %84 = arith.addf %5, %83 : vector<2x64xf32>
    %85 = vector.extract_strided_slice %84 {offsets = [0, 0], sizes = [2, 16], strides = [1, 1]} : vector<2x64xf32> to vector<2x16xf32>
    %cst_39 = arith.constant 0.000000e+00 : f32
    %86 = vector.broadcast %cst_39 : f32 to vector<2x16xf32>
    %87 = arith.subf %86, %85 : vector<2x16xf32>
    %88 = math.exp %87 : vector<2x16xf32>
    %cst_40 = arith.constant 1.000000e+00 : f32
    %89 = vector.broadcast %cst_40 : f32 to vector<2x16xf32>
    %90 = arith.addf %89, %88 : vector<2x16xf32>
    %cst_41 = arith.constant 1.000000e+00 : f32
    %91 = vector.broadcast %cst_41 : f32 to vector<2x16xf32>
    %92 = arith.divf %91, %90 : vector<2x16xf32>
    %93 = vector.extract_strided_slice %84 {offsets = [0, 16], sizes = [2, 16], strides = [1, 1]} : vector<2x64xf32> to vector<2x16xf32>
    %cst_42 = arith.constant 0.000000e+00 : f32
    %94 = vector.broadcast %cst_42 : f32 to vector<2x16xf32>
    %95 = arith.subf %94, %93 : vector<2x16xf32>
    %96 = math.exp %95 : vector<2x16xf32>
    %cst_43 = arith.constant 1.000000e+00 : f32
    %97 = vector.broadcast %cst_43 : f32 to vector<2x16xf32>
    %98 = arith.addf %97, %96 : vector<2x16xf32>
    %cst_44 = arith.constant 1.000000e+00 : f32
    %99 = vector.broadcast %cst_44 : f32 to vector<2x16xf32>
    %100 = arith.divf %99, %98 : vector<2x16xf32>
    %101 = vector.extract_strided_slice %84 {offsets = [0, 32], sizes = [2, 16], strides = [1, 1]} : vector<2x64xf32> to vector<2x16xf32>
    %102 = math.tanh %101 : vector<2x16xf32>
    %103 = vector.extract_strided_slice %84 {offsets = [0, 48], sizes = [2, 16], strides = [1, 1]} : vector<2x64xf32> to vector<2x16xf32>
    %cst_45 = arith.constant 0.000000e+00 : f32
    %104 = vector.broadcast %cst_45 : f32 to vector<2x16xf32>
    %105 = arith.subf %104, %103 : vector<2x16xf32>
    %106 = math.exp %105 : vector<2x16xf32>
    %cst_46 = arith.constant 1.000000e+00 : f32
    %107 = vector.broadcast %cst_46 : f32 to vector<2x16xf32>
    %108 = arith.addf %107, %106 : vector<2x16xf32>
    %cst_47 = arith.constant 1.000000e+00 : f32
    %109 = vector.broadcast %cst_47 : f32 to vector<2x16xf32>
    %110 = arith.divf %109, %108 : vector<2x16xf32>
    %111 = arith.mulf %100, %43 : vector<2x16xf32>
    %112 = arith.mulf %92, %102 : vector<2x16xf32>
    %113 = arith.addf %111, %112 : vector<2x16xf32>
    %114 = math.tanh %113 : vector<2x16xf32>
    %115 = arith.mulf %110, %114 : vector<2x16xf32>
    %116 = tpu.concatenate %115, %80 in 1 : vector<2x16xf32>, vector<2x16xf32> -> vector<2x32xf32>
    %cst_48 = arith.constant dense<0.000000e+00> : vector<2x64xf32>
    %117 = tpu.matmul %116, %7, %cst_48 {dimension_numbers = #tpu.dot_dimension_numbers<[1], [0], [0], [1], [0, 0, 1, 1], [], []>} : vector<2x32xf32>, vector<32x64xf32>, vector<2x64xf32> -> vector<2x64xf32>
    %118 = vector.broadcast %8 : vector<1x64xf32> to vector<2x64xf32>
    %119 = arith.addf %117, %118 : vector<2x64xf32>
    %120 = vector.extract_strided_slice %119 {offsets = [0, 0], sizes = [2, 16], strides = [1, 1]} : vector<2x64xf32> to vector<2x16xf32>
    %cst_49 = arith.constant 0.000000e+00 : f32
    %121 = vector.broadcast %cst_49 : f32 to vector<2x16xf32>
    %122 = arith.subf %121, %120 : vector<2x16xf32>
    %123 = math.exp %122 : vector<2x16xf32>
    %cst_50 = arith.constant 1.000000e+00 : f32
    %124 = vector.broadcast %cst_50 : f32 to vector<2x16xf32>
    %125 = arith.addf %124, %123 : vector<2x16xf32>
    %cst_51 = arith.constant 1.000000e+00 : f32
    %126 = vector.broadcast %cst_51 : f32 to vector<2x16xf32>
    %127 = arith.divf %126, %125 : vector<2x16xf32>
    %128 = vector.extract_strided_slice %119 {offsets = [0, 16], sizes = [2, 16], strides = [1, 1]} : vector<2x64xf32> to vector<2x16xf32>
    %cst_52 = arith.constant 0.000000e+00 : f32
    %129 = vector.broadcast %cst_52 : f32 to vector<2x16xf32>
    %130 = arith.subf %129, %128 : vector<2x16xf32>
    %131 = math.exp %130 : vector<2x16xf32>
    %cst_53 = arith.constant 1.000000e+00 : f32
    %132 = vector.broadcast %cst_53 : f32 to vector<2x16xf32>
    %133 = arith.addf %132, %131 : vector<2x16xf32>
    %cst_54 = arith.constant 1.000000e+00 : f32
    %134 = vector.broadcast %cst_54 : f32 to vector<2x16xf32>
    %135 = arith.divf %134, %133 : vector<2x16xf32>
    %136 = vector.extract_strided_slice %119 {offsets = [0, 32], sizes = [2, 16], strides = [1, 1]} : vector<2x64xf32> to vector<2x16xf32>
    %137 = math.tanh %136 : vector<2x16xf32>
    %138 = vector.extract_strided_slice %119 {offsets = [0, 48], sizes = [2, 16], strides = [1, 1]} : vector<2x64xf32> to vector<2x16xf32>
    %cst_55 = arith.constant 0.000000e+00 : f32
    %139 = vector.broadcast %cst_55 : f32 to vector<2x16xf32>
    %140 = arith.subf %139, %138 : vector<2x16xf32>
    %141 = math.exp %140 : vector<2x16xf32>
    %cst_56 = arith.constant 1.000000e+00 : f32
    %142 = vector.broadcast %cst_56 : f32 to vector<2x16xf32>
    %143 = arith.addf %142, %141 : vector<2x16xf32>
    %cst_57 = arith.constant 1.000000e+00 : f32
    %144 = vector.broadcast %cst_57 : f32 to vector<2x16xf32>
    %145 = arith.divf %144, %143 : vector<2x16xf32>
    %146 = arith.mulf %135, %78 : vector<2x16xf32>
    %147 = arith.mulf %127, %137 : vector<2x16xf32>
    %148 = arith.addf %146, %147 : vector<2x16xf32>
    %149 = math.tanh %148 : vector<2x16xf32>
    %150 = arith.mulf %145, %149 : vector<2x16xf32>
    %151 = vector.shape_cast %150 : vector<2x16xf32> to vector<2x1x16xf32>
    %c0_58 = arith.constant 0 : index
    %c1 = arith.constant 1 : index
    %c0_59 = arith.constant 0 : index
    %152 = vector.load %arg7[%c0_58, %c1, %c0_59] : memref<2x8x16xf32, #tpu.memory_space<vmem>>, vector<2x1x16xf32>
    tpu.vector_store %arg7[%c0_58, %c1, %c0_59], %151 {strides = array<i32>} : memref<2x8x16xf32, #tpu.memory_space<vmem>>, vector<2x1x16xf32>,
    %cst_60 = arith.constant dense<0.000000e+00> : vector<2x64xf32>
    %153 = tpu.matmul %115, %6, %cst_60 {dimension_numbers = #tpu.dot_dimension_numbers<[1], [0], [0], [1], [0, 0, 1, 1], [], []>} : vector<2x16xf32>, vector<16x64xf32>, vector<2x64xf32> -> vector<2x64xf32>
    %154 = arith.addf %5, %153 : vector<2x64xf32>
    %155 = vector.extract_strided_slice %154 {offsets = [0, 0], sizes = [2, 16], strides = [1, 1]} : vector<2x64xf32> to vector<2x16xf32>
    %cst_61 = arith.constant 0.000000e+00 : f32
    %156 = vector.broadcast %cst_61 : f32 to vector<2x16xf32>
    %157 = arith.subf %156, %155 : vector<2x16xf32>
    %158 = math.exp %157 : vector<2x16xf32>
    %cst_62 = arith.constant 1.000000e+00 : f32
    %159 = vector.broadcast %cst_62 : f32 to vector<2x16xf32>
    %160 = arith.addf %159, %158 : vector<2x16xf32>
    %cst_63 = arith.constant 1.000000e+00 : f32
    %161 = vector.broadcast %cst_63 : f32 to vector<2x16xf32>
    %162 = arith.divf %161, %160 : vector<2x16xf32>
    %163 = vector.extract_strided_slice %154 {offsets = [0, 16], sizes = [2, 16], strides = [1, 1]} : vector<2x64xf32> to vector<2x16xf32>
    %cst_64 = arith.constant 0.000000e+00 : f32
    %164 = vector.broadcast %cst_64 : f32 to vector<2x16xf32>
    %165 = arith.subf %164, %163 : vector<2x16xf32>
    %166 = math.exp %165 : vector<2x16xf32>
    %cst_65 = arith.constant 1.000000e+00 : f32
    %167 = vector.broadcast %cst_65 : f32 to vector<2x16xf32>
    %168 = arith.addf %167, %166 : vector<2x16xf32>
    %cst_66 = arith.constant 1.000000e+00 : f32
    %169 = vector.broadcast %cst_66 : f32 to vector<2x16xf32>
    %170 = arith.divf %169, %168 : vector<2x16xf32>
    %171 = vector.extract_strided_slice %154 {offsets = [0, 32], sizes = [2, 16], strides = [1, 1]} : vector<2x64xf32> to vector<2x16xf32>
    %172 = math.tanh %171 : vector<2x16xf32>
    %173 = vector.extract_strided_slice %154 {offsets = [0, 48], sizes = [2, 16], strides = [1, 1]} : vector<2x64xf32> to vector<2x16xf32>
    %cst_67 = arith.constant 0.000000e+00 : f32
    %174 = vector.broadcast %cst_67 : f32 to vector<2x16xf32>
    %175 = arith.subf %174, %173 : vector<2x16xf32>
    %176 = math.exp %175 : vector<2x16xf32>
    %cst_68 = arith.constant 1.000000e+00 : f32
    %177 = vector.broadcast %cst_68 : f32 to vector<2x16xf32>
    %178 = arith.addf %177, %176 : vector<2x16xf32>
    %cst_69 = arith.constant 1.000000e+00 : f32
    %179 = vector.broadcast %cst_69 : f32 to vector<2x16xf32>
    %180 = arith.divf %179, %178 : vector<2x16xf32>
    %181 = arith.mulf %170, %113 : vector<2x16xf32>
    %182 = arith.mulf %162, %172 : vector<2x16xf32>
    %183 = arith.addf %181, %182 : vector<2x16xf32>
    %184 = math.tanh %183 : vector<2x16xf32>
    %185 = arith.mulf %180, %184 : vector<2x16xf32>
    %186 = tpu.concatenate %185, %150 in 1 : vector<2x16xf32>, vector<2x16xf32> -> vector<2x32xf32>
    %cst_70 = arith.constant dense<0.000000e+00> : vector<2x64xf32>
    %187 = tpu.matmul %186, %7, %cst_70 {dimension_numbers = #tpu.dot_dimension_numbers<[1], [0], [0], [1], [0, 0, 1, 1], [], []>} : vector<2x32xf32>, vector<32x64xf32>, vector<2x64xf32> -> vector<2x64xf32>
    %188 = vector.broadcast %8 : vector<1x64xf32> to vector<2x64xf32>
    %189 = arith.addf %187, %188 : vector<2x64xf32>
    %190 = vector.extract_strided_slice %189 {offsets = [0, 0], sizes = [2, 16], strides = [1, 1]} : vector<2x64xf32> to vector<2x16xf32>
    %cst_71 = arith.constant 0.000000e+00 : f32
    %191 = vector.broadcast %cst_71 : f32 to vector<2x16xf32>
    %192 = arith.subf %191, %190 : vector<2x16xf32>
    %193 = math.exp %192 : vector<2x16xf32>
    %cst_72 = arith.constant 1.000000e+00 : f32
    %194 = vector.broadcast %cst_72 : f32 to vector<2x16xf32>
    %195 = arith.addf %194, %193 : vector<2x16xf32>
    %cst_73 = arith.constant 1.000000e+00 : f32
    %196 = vector.broadcast %cst_73 : f32 to vector<2x16xf32>
    %197 = arith.divf %196, %195 : vector<2x16xf32>
    %198 = vector.extract_strided_slice %189 {offsets = [0, 16], sizes = [2, 16], strides = [1, 1]} : vector<2x64xf32> to vector<2x16xf32>
    %cst_74 = arith.constant 0.000000e+00 : f32
    %199 = vector.broadcast %cst_74 : f32 to vector<2x16xf32>
    %200 = arith.subf %199, %198 : vector<2x16xf32>
    %201 = math.exp %200 : vector<2x16xf32>
    %cst_75 = arith.constant 1.000000e+00 : f32
    %202 = vector.broadcast %cst_75 : f32 to vector<2x16xf32>
    %203 = arith.addf %202, %201 : vector<2x16xf32>
    %cst_76 = arith.constant 1.000000e+00 : f32
    %204 = vector.broadcast %cst_76 : f32 to vector<2x16xf32>
    %205 = arith.divf %204, %203 : vector<2x16xf32>
    %206 = vector.extract_strided_slice %189 {offsets = [0, 32], sizes = [2, 16], strides = [1, 1]} : vector<2x64xf32> to vector<2x16xf32>
    %207 = math.tanh %206 : vector<2x16xf32>
    %208 = vector.extract_strided_slice %189 {offsets = [0, 48], sizes = [2, 16], strides = [1, 1]} : vector<2x64xf32> to vector<2x16xf32>
    %cst_77 = arith.constant 0.000000e+00 : f32
    %209 = vector.broadcast %cst_77 : f32 to vector<2x16xf32>
    %210 = arith.subf %209, %208 : vector<2x16xf32>
    %211 = math.exp %210 : vector<2x16xf32>
    %cst_78 = arith.constant 1.000000e+00 : f32
    %212 = vector.broadcast %cst_78 : f32 to vector<2x16xf32>
    %213 = arith.addf %212, %211 : vector<2x16xf32>
    %cst_79 = arith.constant 1.000000e+00 : f32
    %214 = vector.broadcast %cst_79 : f32 to vector<2x16xf32>
    %215 = arith.divf %214, %213 : vector<2x16xf32>
    %216 = arith.mulf %205, %148 : vector<2x16xf32>
    %217 = arith.mulf %197, %207 : vector<2x16xf32>
    %218 = arith.addf %216, %217 : vector<2x16xf32>
    %219 = math.tanh %218 : vector<2x16xf32>
    %220 = arith.mulf %215, %219 : vector<2x16xf32>
    %221 = vector.shape_cast %220 : vector<2x16xf32> to vector<2x1x16xf32>
    %c0_80 = arith.constant 0 : index
    %c2 = arith.constant 2 : index
    %c0_81 = arith.constant 0 : index
    %222 = vector.load %arg7[%c0_80, %c2, %c0_81] : memref<2x8x16xf32, #tpu.memory_space<vmem>>, vector<2x1x16xf32>
    tpu.vector_store %arg7[%c0_80, %c2, %c0_81], %221 {strides = array<i32>} : memref<2x8x16xf32, #tpu.memory_space<vmem>>, vector<2x1x16xf32>,
    %cst_82 = arith.constant dense<0.000000e+00> : vector<2x64xf32>
    %223 = tpu.matmul %185, %6, %cst_82 {dimension_numbers = #tpu.dot_dimension_numbers<[1], [0], [0], [1], [0, 0, 1, 1], [], []>} : vector<2x16xf32>, vector<16x64xf32>, vector<2x64xf32> -> vector<2x64xf32>
    %224 = arith.addf %5, %223 : vector<2x64xf32>
    %225 = vector.extract_strided_slice %224 {offsets = [0, 0], sizes = [2, 16], strides = [1, 1]} : vector<2x64xf32> to vector<2x16xf32>
    %cst_83 = arith.constant 0.000000e+00 : f32
    %226 = vector.broadcast %cst_83 : f32 to vector<2x16xf32>
    %227 = arith.subf %226, %225 : vector<2x16xf32>
    %228 = math.exp %227 : vector<2x16xf32>
    %cst_84 = arith.constant 1.000000e+00 : f32
    %229 = vector.broadcast %cst_84 : f32 to vector<2x16xf32>
    %230 = arith.addf %229, %228 : vector<2x16xf32>
    %cst_85 = arith.constant 1.000000e+00 : f32
    %231 = vector.broadcast %cst_85 : f32 to vector<2x16xf32>
    %232 = arith.divf %231, %230 : vector<2x16xf32>
    %233 = vector.extract_strided_slice %224 {offsets = [0, 16], sizes = [2, 16], strides = [1, 1]} : vector<2x64xf32> to vector<2x16xf32>
    %cst_86 = arith.constant 0.000000e+00 : f32
    %234 = vector.broadcast %cst_86 : f32 to vector<2x16xf32>
    %235 = arith.subf %234, %233 : vector<2x16xf32>
    %236 = math.exp %235 : vector<2x16xf32>
    %cst_87 = arith.constant 1.000000e+00 : f32
    %237 = vector.broadcast %cst_87 : f32 to vector<2x16xf32>
    %238 = arith.addf %237, %236 : vector<2x16xf32>
    %cst_88 = arith.constant 1.000000e+00 : f32
    %239 = vector.broadcast %cst_88 : f32 to vector<2x16xf32>
    %240 = arith.divf %239, %238 : vector<2x16xf32>
    %241 = vector.extract_strided_slice %224 {offsets = [0, 32], sizes = [2, 16], strides = [1, 1]} : vector<2x64xf32> to vector<2x16xf32>
    %242 = math.tanh %241 : vector<2x16xf32>
    %243 = vector.extract_strided_slice %224 {offsets = [0, 48], sizes = [2, 16], strides = [1, 1]} : vector<2x64xf32> to vector<2x16xf32>
    %cst_89 = arith.constant 0.000000e+00 : f32
    %244 = vector.broadcast %cst_89 : f32 to vector<2x16xf32>
    %245 = arith.subf %244, %243 : vector<2x16xf32>
    %246 = math.exp %245 : vector<2x16xf32>
    %cst_90 = arith.constant 1.000000e+00 : f32
    %247 = vector.broadcast %cst_90 : f32 to vector<2x16xf32>
    %248 = arith.addf %247, %246 : vector<2x16xf32>
    %cst_91 = arith.constant 1.000000e+00 : f32
    %249 = vector.broadcast %cst_91 : f32 to vector<2x16xf32>
    %250 = arith.divf %249, %248 : vector<2x16xf32>
    %251 = arith.mulf %240, %183 : vector<2x16xf32>
    %252 = arith.mulf %232, %242 : vector<2x16xf32>
    %253 = arith.addf %251, %252 : vector<2x16xf32>
    %254 = math.tanh %253 : vector<2x16xf32>
    %255 = arith.mulf %250, %254 : vector<2x16xf32>
    %256 = tpu.concatenate %255, %220 in 1 : vector<2x16xf32>, vector<2x16xf32> -> vector<2x32xf32>
    %cst_92 = arith.constant dense<0.000000e+00> : vector<2x64xf32>
    %257 = tpu.matmul %256, %7, %cst_92 {dimension_numbers = #tpu.dot_dimension_numbers<[1], [0], [0], [1], [0, 0, 1, 1], [], []>} : vector<2x32xf32>, vector<32x64xf32>, vector<2x64xf32> -> vector<2x64xf32>
    %258 = vector.broadcast %8 : vector<1x64xf32> to vector<2x64xf32>
    %259 = arith.addf %257, %258 : vector<2x64xf32>
    %260 = vector.extract_strided_slice %259 {offsets = [0, 0], sizes = [2, 16], strides = [1, 1]} : vector<2x64xf32> to vector<2x16xf32>
    %cst_93 = arith.constant 0.000000e+00 : f32
    %261 = vector.broadcast %cst_93 : f32 to vector<2x16xf32>
    %262 = arith.subf %261, %260 : vector<2x16xf32>
    %263 = math.exp %262 : vector<2x16xf32>
    %cst_94 = arith.constant 1.000000e+00 : f32
    %264 = vector.broadcast %cst_94 : f32 to vector<2x16xf32>
    %265 = arith.addf %264, %263 : vector<2x16xf32>
    %cst_95 = arith.constant 1.000000e+00 : f32
    %266 = vector.broadcast %cst_95 : f32 to vector<2x16xf32>
    %267 = arith.divf %266, %265 : vector<2x16xf32>
    %268 = vector.extract_strided_slice %259 {offsets = [0, 16], sizes = [2, 16], strides = [1, 1]} : vector<2x64xf32> to vector<2x16xf32>
    %cst_96 = arith.constant 0.000000e+00 : f32
    %269 = vector.broadcast %cst_96 : f32 to vector<2x16xf32>
    %270 = arith.subf %269, %268 : vector<2x16xf32>
    %271 = math.exp %270 : vector<2x16xf32>
    %cst_97 = arith.constant 1.000000e+00 : f32
    %272 = vector.broadcast %cst_97 : f32 to vector<2x16xf32>
    %273 = arith.addf %272, %271 : vector<2x16xf32>
    %cst_98 = arith.constant 1.000000e+00 : f32
    %274 = vector.broadcast %cst_98 : f32 to vector<2x16xf32>
    %275 = arith.divf %274, %273 : vector<2x16xf32>
    %276 = vector.extract_strided_slice %259 {offsets = [0, 32], sizes = [2, 16], strides = [1, 1]} : vector<2x64xf32> to vector<2x16xf32>
    %277 = math.tanh %276 : vector<2x16xf32>
    %278 = vector.extract_strided_slice %259 {offsets = [0, 48], sizes = [2, 16], strides = [1, 1]} : vector<2x64xf32> to vector<2x16xf32>
    %cst_99 = arith.constant 0.000000e+00 : f32
    %279 = vector.broadcast %cst_99 : f32 to vector<2x16xf32>
    %280 = arith.subf %279, %278 : vector<2x16xf32>
    %281 = math.exp %280 : vector<2x16xf32>
    %cst_100 = arith.constant 1.000000e+00 : f32
    %282 = vector.broadcast %cst_100 : f32 to vector<2x16xf32>
    %283 = arith.addf %282, %281 : vector<2x16xf32>
    %cst_101 = arith.constant 1.000000e+00 : f32
    %284 = vector.broadcast %cst_101 : f32 to vector<2x16xf32>
    %285 = arith.divf %284, %283 : vector<2x16xf32>
    %286 = arith.mulf %275, %218 : vector<2x16xf32>
    %287 = arith.mulf %267, %277 : vector<2x16xf32>
    %288 = arith.addf %286, %287 : vector<2x16xf32>
    %289 = math.tanh %288 : vector<2x16xf32>
    %290 = arith.mulf %285, %289 : vector<2x16xf32>
    %291 = vector.shape_cast %290 : vector<2x16xf32> to vector<2x1x16xf32>
    %c0_102 = arith.constant 0 : index
    %c3 = arith.constant 3 : index
    %c0_103 = arith.constant 0 : index
    %292 = vector.load %arg7[%c0_102, %c3, %c0_103] : memref<2x8x16xf32, #tpu.memory_space<vmem>>, vector<2x1x16xf32>
    tpu.vector_store %arg7[%c0_102, %c3, %c0_103], %291 {strides = array<i32>} : memref<2x8x16xf32, #tpu.memory_space<vmem>>, vector<2x1x16xf32>,
    %cst_104 = arith.constant dense<0.000000e+00> : vector<2x64xf32>
    %293 = tpu.matmul %255, %6, %cst_104 {dimension_numbers = #tpu.dot_dimension_numbers<[1], [0], [0], [1], [0, 0, 1, 1], [], []>} : vector<2x16xf32>, vector<16x64xf32>, vector<2x64xf32> -> vector<2x64xf32>
    %294 = arith.addf %5, %293 : vector<2x64xf32>
    %295 = vector.extract_strided_slice %294 {offsets = [0, 0], sizes = [2, 16], strides = [1, 1]} : vector<2x64xf32> to vector<2x16xf32>
    %cst_105 = arith.constant 0.000000e+00 : f32
    %296 = vector.broadcast %cst_105 : f32 to vector<2x16xf32>
    %297 = arith.subf %296, %295 : vector<2x16xf32>
    %298 = math.exp %297 : vector<2x16xf32>
    %cst_106 = arith.constant 1.000000e+00 : f32
    %299 = vector.broadcast %cst_106 : f32 to vector<2x16xf32>
    %300 = arith.addf %299, %298 : vector<2x16xf32>
    %cst_107 = arith.constant 1.000000e+00 : f32
    %301 = vector.broadcast %cst_107 : f32 to vector<2x16xf32>
    %302 = arith.divf %301, %300 : vector<2x16xf32>
    %303 = vector.extract_strided_slice %294 {offsets = [0, 16], sizes = [2, 16], strides = [1, 1]} : vector<2x64xf32> to vector<2x16xf32>
    %cst_108 = arith.constant 0.000000e+00 : f32
    %304 = vector.broadcast %cst_108 : f32 to vector<2x16xf32>
    %305 = arith.subf %304, %303 : vector<2x16xf32>
    %306 = math.exp %305 : vector<2x16xf32>
    %cst_109 = arith.constant 1.000000e+00 : f32
    %307 = vector.broadcast %cst_109 : f32 to vector<2x16xf32>
    %308 = arith.addf %307, %306 : vector<2x16xf32>
    %cst_110 = arith.constant 1.000000e+00 : f32
    %309 = vector.broadcast %cst_110 : f32 to vector<2x16xf32>
    %310 = arith.divf %309, %308 : vector<2x16xf32>
    %311 = vector.extract_strided_slice %294 {offsets = [0, 32], sizes = [2, 16], strides = [1, 1]} : vector<2x64xf32> to vector<2x16xf32>
    %312 = math.tanh %311 : vector<2x16xf32>
    %313 = vector.extract_strided_slice %294 {offsets = [0, 48], sizes = [2, 16], strides = [1, 1]} : vector<2x64xf32> to vector<2x16xf32>
    %cst_111 = arith.constant 0.000000e+00 : f32
    %314 = vector.broadcast %cst_111 : f32 to vector<2x16xf32>
    %315 = arith.subf %314, %313 : vector<2x16xf32>
    %316 = math.exp %315 : vector<2x16xf32>
    %cst_112 = arith.constant 1.000000e+00 : f32
    %317 = vector.broadcast %cst_112 : f32 to vector<2x16xf32>
    %318 = arith.addf %317, %316 : vector<2x16xf32>
    %cst_113 = arith.constant 1.000000e+00 : f32
    %319 = vector.broadcast %cst_113 : f32 to vector<2x16xf32>
    %320 = arith.divf %319, %318 : vector<2x16xf32>
    %321 = arith.mulf %310, %253 : vector<2x16xf32>
    %322 = arith.mulf %302, %312 : vector<2x16xf32>
    %323 = arith.addf %321, %322 : vector<2x16xf32>
    %324 = math.tanh %323 : vector<2x16xf32>
    %325 = arith.mulf %320, %324 : vector<2x16xf32>
    %326 = tpu.concatenate %325, %290 in 1 : vector<2x16xf32>, vector<2x16xf32> -> vector<2x32xf32>
    %cst_114 = arith.constant dense<0.000000e+00> : vector<2x64xf32>
    %327 = tpu.matmul %326, %7, %cst_114 {dimension_numbers = #tpu.dot_dimension_numbers<[1], [0], [0], [1], [0, 0, 1, 1], [], []>} : vector<2x32xf32>, vector<32x64xf32>, vector<2x64xf32> -> vector<2x64xf32>
    %328 = vector.broadcast %8 : vector<1x64xf32> to vector<2x64xf32>
    %329 = arith.addf %327, %328 : vector<2x64xf32>
    %330 = vector.extract_strided_slice %329 {offsets = [0, 0], sizes = [2, 16], strides = [1, 1]} : vector<2x64xf32> to vector<2x16xf32>
    %cst_115 = arith.constant 0.000000e+00 : f32
    %331 = vector.broadcast %cst_115 : f32 to vector<2x16xf32>
    %332 = arith.subf %331, %330 : vector<2x16xf32>
    %333 = math.exp %332 : vector<2x16xf32>
    %cst_116 = arith.constant 1.000000e+00 : f32
    %334 = vector.broadcast %cst_116 : f32 to vector<2x16xf32>
    %335 = arith.addf %334, %333 : vector<2x16xf32>
    %cst_117 = arith.constant 1.000000e+00 : f32
    %336 = vector.broadcast %cst_117 : f32 to vector<2x16xf32>
    %337 = arith.divf %336, %335 : vector<2x16xf32>
    %338 = vector.extract_strided_slice %329 {offsets = [0, 16], sizes = [2, 16], strides = [1, 1]} : vector<2x64xf32> to vector<2x16xf32>
    %cst_118 = arith.constant 0.000000e+00 : f32
    %339 = vector.broadcast %cst_118 : f32 to vector<2x16xf32>
    %340 = arith.subf %339, %338 : vector<2x16xf32>
    %341 = math.exp %340 : vector<2x16xf32>
    %cst_119 = arith.constant 1.000000e+00 : f32
    %342 = vector.broadcast %cst_119 : f32 to vector<2x16xf32>
    %343 = arith.addf %342, %341 : vector<2x16xf32>
    %cst_120 = arith.constant 1.000000e+00 : f32
    %344 = vector.broadcast %cst_120 : f32 to vector<2x16xf32>
    %345 = arith.divf %344, %343 : vector<2x16xf32>
    %346 = vector.extract_strided_slice %329 {offsets = [0, 32], sizes = [2, 16], strides = [1, 1]} : vector<2x64xf32> to vector<2x16xf32>
    %347 = math.tanh %346 : vector<2x16xf32>
    %348 = vector.extract_strided_slice %329 {offsets = [0, 48], sizes = [2, 16], strides = [1, 1]} : vector<2x64xf32> to vector<2x16xf32>
    %cst_121 = arith.constant 0.000000e+00 : f32
    %349 = vector.broadcast %cst_121 : f32 to vector<2x16xf32>
    %350 = arith.subf %349, %348 : vector<2x16xf32>
    %351 = math.exp %350 : vector<2x16xf32>
    %cst_122 = arith.constant 1.000000e+00 : f32
    %352 = vector.broadcast %cst_122 : f32 to vector<2x16xf32>
    %353 = arith.addf %352, %351 : vector<2x16xf32>
    %cst_123 = arith.constant 1.000000e+00 : f32
    %354 = vector.broadcast %cst_123 : f32 to vector<2x16xf32>
    %355 = arith.divf %354, %353 : vector<2x16xf32>
    %356 = arith.mulf %345, %288 : vector<2x16xf32>
    %357 = arith.mulf %337, %347 : vector<2x16xf32>
    %358 = arith.addf %356, %357 : vector<2x16xf32>
    %359 = math.tanh %358 : vector<2x16xf32>
    %360 = arith.mulf %355, %359 : vector<2x16xf32>
    %361 = vector.shape_cast %360 : vector<2x16xf32> to vector<2x1x16xf32>
    %c0_124 = arith.constant 0 : index
    %c4 = arith.constant 4 : index
    %c0_125 = arith.constant 0 : index
    %362 = vector.load %arg7[%c0_124, %c4, %c0_125] : memref<2x8x16xf32, #tpu.memory_space<vmem>>, vector<2x1x16xf32>
    tpu.vector_store %arg7[%c0_124, %c4, %c0_125], %361 {strides = array<i32>} : memref<2x8x16xf32, #tpu.memory_space<vmem>>, vector<2x1x16xf32>,
    %cst_126 = arith.constant dense<0.000000e+00> : vector<2x64xf32>
    %363 = tpu.matmul %325, %6, %cst_126 {dimension_numbers = #tpu.dot_dimension_numbers<[1], [0], [0], [1], [0, 0, 1, 1], [], []>} : vector<2x16xf32>, vector<16x64xf32>, vector<2x64xf32> -> vector<2x64xf32>
    %364 = arith.addf %5, %363 : vector<2x64xf32>
    %365 = vector.extract_strided_slice %364 {offsets = [0, 0], sizes = [2, 16], strides = [1, 1]} : vector<2x64xf32> to vector<2x16xf32>
    %cst_127 = arith.constant 0.000000e+00 : f32
    %366 = vector.broadcast %cst_127 : f32 to vector<2x16xf32>
    %367 = arith.subf %366, %365 : vector<2x16xf32>
    %368 = math.exp %367 : vector<2x16xf32>
    %cst_128 = arith.constant 1.000000e+00 : f32
    %369 = vector.broadcast %cst_128 : f32 to vector<2x16xf32>
    %370 = arith.addf %369, %368 : vector<2x16xf32>
    %cst_129 = arith.constant 1.000000e+00 : f32
    %371 = vector.broadcast %cst_129 : f32 to vector<2x16xf32>
    %372 = arith.divf %371, %370 : vector<2x16xf32>
    %373 = vector.extract_strided_slice %364 {offsets = [0, 16], sizes = [2, 16], strides = [1, 1]} : vector<2x64xf32> to vector<2x16xf32>
    %cst_130 = arith.constant 0.000000e+00 : f32
    %374 = vector.broadcast %cst_130 : f32 to vector<2x16xf32>
    %375 = arith.subf %374, %373 : vector<2x16xf32>
    %376 = math.exp %375 : vector<2x16xf32>
    %cst_131 = arith.constant 1.000000e+00 : f32
    %377 = vector.broadcast %cst_131 : f32 to vector<2x16xf32>
    %378 = arith.addf %377, %376 : vector<2x16xf32>
    %cst_132 = arith.constant 1.000000e+00 : f32
    %379 = vector.broadcast %cst_132 : f32 to vector<2x16xf32>
    %380 = arith.divf %379, %378 : vector<2x16xf32>
    %381 = vector.extract_strided_slice %364 {offsets = [0, 32], sizes = [2, 16], strides = [1, 1]} : vector<2x64xf32> to vector<2x16xf32>
    %382 = math.tanh %381 : vector<2x16xf32>
    %383 = vector.extract_strided_slice %364 {offsets = [0, 48], sizes = [2, 16], strides = [1, 1]} : vector<2x64xf32> to vector<2x16xf32>
    %cst_133 = arith.constant 0.000000e+00 : f32
    %384 = vector.broadcast %cst_133 : f32 to vector<2x16xf32>
    %385 = arith.subf %384, %383 : vector<2x16xf32>
    %386 = math.exp %385 : vector<2x16xf32>
    %cst_134 = arith.constant 1.000000e+00 : f32
    %387 = vector.broadcast %cst_134 : f32 to vector<2x16xf32>
    %388 = arith.addf %387, %386 : vector<2x16xf32>
    %cst_135 = arith.constant 1.000000e+00 : f32
    %389 = vector.broadcast %cst_135 : f32 to vector<2x16xf32>
    %390 = arith.divf %389, %388 : vector<2x16xf32>
    %391 = arith.mulf %380, %323 : vector<2x16xf32>
    %392 = arith.mulf %372, %382 : vector<2x16xf32>
    %393 = arith.addf %391, %392 : vector<2x16xf32>
    %394 = math.tanh %393 : vector<2x16xf32>
    %395 = arith.mulf %390, %394 : vector<2x16xf32>
    %396 = tpu.concatenate %395, %360 in 1 : vector<2x16xf32>, vector<2x16xf32> -> vector<2x32xf32>
    %cst_136 = arith.constant dense<0.000000e+00> : vector<2x64xf32>
    %397 = tpu.matmul %396, %7, %cst_136 {dimension_numbers = #tpu.dot_dimension_numbers<[1], [0], [0], [1], [0, 0, 1, 1], [], []>} : vector<2x32xf32>, vector<32x64xf32>, vector<2x64xf32> -> vector<2x64xf32>
    %398 = vector.broadcast %8 : vector<1x64xf32> to vector<2x64xf32>
    %399 = arith.addf %397, %398 : vector<2x64xf32>
    %400 = vector.extract_strided_slice %399 {offsets = [0, 0], sizes = [2, 16], strides = [1, 1]} : vector<2x64xf32> to vector<2x16xf32>
    %cst_137 = arith.constant 0.000000e+00 : f32
    %401 = vector.broadcast %cst_137 : f32 to vector<2x16xf32>
    %402 = arith.subf %401, %400 : vector<2x16xf32>
    %403 = math.exp %402 : vector<2x16xf32>
    %cst_138 = arith.constant 1.000000e+00 : f32
    %404 = vector.broadcast %cst_138 : f32 to vector<2x16xf32>
    %405 = arith.addf %404, %403 : vector<2x16xf32>
    %cst_139 = arith.constant 1.000000e+00 : f32
    %406 = vector.broadcast %cst_139 : f32 to vector<2x16xf32>
    %407 = arith.divf %406, %405 : vector<2x16xf32>
    %408 = vector.extract_strided_slice %399 {offsets = [0, 16], sizes = [2, 16], strides = [1, 1]} : vector<2x64xf32> to vector<2x16xf32>
    %cst_140 = arith.constant 0.000000e+00 : f32
    %409 = vector.broadcast %cst_140 : f32 to vector<2x16xf32>
    %410 = arith.subf %409, %408 : vector<2x16xf32>
    %411 = math.exp %410 : vector<2x16xf32>
    %cst_141 = arith.constant 1.000000e+00 : f32
    %412 = vector.broadcast %cst_141 : f32 to vector<2x16xf32>
    %413 = arith.addf %412, %411 : vector<2x16xf32>
    %cst_142 = arith.constant 1.000000e+00 : f32
    %414 = vector.broadcast %cst_142 : f32 to vector<2x16xf32>
    %415 = arith.divf %414, %413 : vector<2x16xf32>
    %416 = vector.extract_strided_slice %399 {offsets = [0, 32], sizes = [2, 16], strides = [1, 1]} : vector<2x64xf32> to vector<2x16xf32>
    %417 = math.tanh %416 : vector<2x16xf32>
    %418 = vector.extract_strided_slice %399 {offsets = [0, 48], sizes = [2, 16], strides = [1, 1]} : vector<2x64xf32> to vector<2x16xf32>
    %cst_143 = arith.constant 0.000000e+00 : f32
    %419 = vector.broadcast %cst_143 : f32 to vector<2x16xf32>
    %420 = arith.subf %419, %418 : vector<2x16xf32>
    %421 = math.exp %420 : vector<2x16xf32>
    %cst_144 = arith.constant 1.000000e+00 : f32
    %422 = vector.broadcast %cst_144 : f32 to vector<2x16xf32>
    %423 = arith.addf %422, %421 : vector<2x16xf32>
    %cst_145 = arith.constant 1.000000e+00 : f32
    %424 = vector.broadcast %cst_145 : f32 to vector<2x16xf32>
    %425 = arith.divf %424, %423 : vector<2x16xf32>
    %426 = arith.mulf %415, %358 : vector<2x16xf32>
    %427 = arith.mulf %407, %417 : vector<2x16xf32>
    %428 = arith.addf %426, %427 : vector<2x16xf32>
    %429 = math.tanh %428 : vector<2x16xf32>
    %430 = arith.mulf %425, %429 : vector<2x16xf32>
    %431 = vector.shape_cast %430 : vector<2x16xf32> to vector<2x1x16xf32>
    %c0_146 = arith.constant 0 : index
    %c5 = arith.constant 5 : index
    %c0_147 = arith.constant 0 : index
    %432 = vector.load %arg7[%c0_146, %c5, %c0_147] : memref<2x8x16xf32, #tpu.memory_space<vmem>>, vector<2x1x16xf32>
    tpu.vector_store %arg7[%c0_146, %c5, %c0_147], %431 {strides = array<i32>} : memref<2x8x16xf32, #tpu.memory_space<vmem>>, vector<2x1x16xf32>,
    %cst_148 = arith.constant dense<0.000000e+00> : vector<2x64xf32>
    %433 = tpu.matmul %395, %6, %cst_148 {dimension_numbers = #tpu.dot_dimension_numbers<[1], [0], [0], [1], [0, 0, 1, 1], [], []>} : vector<2x16xf32>, vector<16x64xf32>, vector<2x64xf32> -> vector<2x64xf32>
    %434 = arith.addf %5, %433 : vector<2x64xf32>
    %435 = vector.extract_strided_slice %434 {offsets = [0, 0], sizes = [2, 16], strides = [1, 1]} : vector<2x64xf32> to vector<2x16xf32>
    %cst_149 = arith.constant 0.000000e+00 : f32
    %436 = vector.broadcast %cst_149 : f32 to vector<2x16xf32>
    %437 = arith.subf %436, %435 : vector<2x16xf32>
    %438 = math.exp %437 : vector<2x16xf32>
    %cst_150 = arith.constant 1.000000e+00 : f32
    %439 = vector.broadcast %cst_150 : f32 to vector<2x16xf32>
    %440 = arith.addf %439, %438 : vector<2x16xf32>
    %cst_151 = arith.constant 1.000000e+00 : f32
    %441 = vector.broadcast %cst_151 : f32 to vector<2x16xf32>
    %442 = arith.divf %441, %440 : vector<2x16xf32>
    %443 = vector.extract_strided_slice %434 {offsets = [0, 16], sizes = [2, 16], strides = [1, 1]} : vector<2x64xf32> to vector<2x16xf32>
    %cst_152 = arith.constant 0.000000e+00 : f32
    %444 = vector.broadcast %cst_152 : f32 to vector<2x16xf32>
    %445 = arith.subf %444, %443 : vector<2x16xf32>
    %446 = math.exp %445 : vector<2x16xf32>
    %cst_153 = arith.constant 1.000000e+00 : f32
    %447 = vector.broadcast %cst_153 : f32 to vector<2x16xf32>
    %448 = arith.addf %447, %446 : vector<2x16xf32>
    %cst_154 = arith.constant 1.000000e+00 : f32
    %449 = vector.broadcast %cst_154 : f32 to vector<2x16xf32>
    %450 = arith.divf %449, %448 : vector<2x16xf32>
    %451 = vector.extract_strided_slice %434 {offsets = [0, 32], sizes = [2, 16], strides = [1, 1]} : vector<2x64xf32> to vector<2x16xf32>
    %452 = math.tanh %451 : vector<2x16xf32>
    %453 = vector.extract_strided_slice %434 {offsets = [0, 48], sizes = [2, 16], strides = [1, 1]} : vector<2x64xf32> to vector<2x16xf32>
    %cst_155 = arith.constant 0.000000e+00 : f32
    %454 = vector.broadcast %cst_155 : f32 to vector<2x16xf32>
    %455 = arith.subf %454, %453 : vector<2x16xf32>
    %456 = math.exp %455 : vector<2x16xf32>
    %cst_156 = arith.constant 1.000000e+00 : f32
    %457 = vector.broadcast %cst_156 : f32 to vector<2x16xf32>
    %458 = arith.addf %457, %456 : vector<2x16xf32>
    %cst_157 = arith.constant 1.000000e+00 : f32
    %459 = vector.broadcast %cst_157 : f32 to vector<2x16xf32>
    %460 = arith.divf %459, %458 : vector<2x16xf32>
    %461 = arith.mulf %450, %393 : vector<2x16xf32>
    %462 = arith.mulf %442, %452 : vector<2x16xf32>
    %463 = arith.addf %461, %462 : vector<2x16xf32>
    %464 = math.tanh %463 : vector<2x16xf32>
    %465 = arith.mulf %460, %464 : vector<2x16xf32>
    %466 = tpu.concatenate %465, %430 in 1 : vector<2x16xf32>, vector<2x16xf32> -> vector<2x32xf32>
    %cst_158 = arith.constant dense<0.000000e+00> : vector<2x64xf32>
    %467 = tpu.matmul %466, %7, %cst_158 {dimension_numbers = #tpu.dot_dimension_numbers<[1], [0], [0], [1], [0, 0, 1, 1], [], []>} : vector<2x32xf32>, vector<32x64xf32>, vector<2x64xf32> -> vector<2x64xf32>
    %468 = vector.broadcast %8 : vector<1x64xf32> to vector<2x64xf32>
    %469 = arith.addf %467, %468 : vector<2x64xf32>
    %470 = vector.extract_strided_slice %469 {offsets = [0, 0], sizes = [2, 16], strides = [1, 1]} : vector<2x64xf32> to vector<2x16xf32>
    %cst_159 = arith.constant 0.000000e+00 : f32
    %471 = vector.broadcast %cst_159 : f32 to vector<2x16xf32>
    %472 = arith.subf %471, %470 : vector<2x16xf32>
    %473 = math.exp %472 : vector<2x16xf32>
    %cst_160 = arith.constant 1.000000e+00 : f32
    %474 = vector.broadcast %cst_160 : f32 to vector<2x16xf32>
    %475 = arith.addf %474, %473 : vector<2x16xf32>
    %cst_161 = arith.constant 1.000000e+00 : f32
    %476 = vector.broadcast %cst_161 : f32 to vector<2x16xf32>
    %477 = arith.divf %476, %475 : vector<2x16xf32>
    %478 = vector.extract_strided_slice %469 {offsets = [0, 16], sizes = [2, 16], strides = [1, 1]} : vector<2x64xf32> to vector<2x16xf32>
    %cst_162 = arith.constant 0.000000e+00 : f32
    %479 = vector.broadcast %cst_162 : f32 to vector<2x16xf32>
    %480 = arith.subf %479, %478 : vector<2x16xf32>
    %481 = math.exp %480 : vector<2x16xf32>
    %cst_163 = arith.constant 1.000000e+00 : f32
    %482 = vector.broadcast %cst_163 : f32 to vector<2x16xf32>
    %483 = arith.addf %482, %481 : vector<2x16xf32>
    %cst_164 = arith.constant 1.000000e+00 : f32
    %484 = vector.broadcast %cst_164 : f32 to vector<2x16xf32>
    %485 = arith.divf %484, %483 : vector<2x16xf32>
    %486 = vector.extract_strided_slice %469 {offsets = [0, 32], sizes = [2, 16], strides = [1, 1]} : vector<2x64xf32> to vector<2x16xf32>
    %487 = math.tanh %486 : vector<2x16xf32>
    %488 = vector.extract_strided_slice %469 {offsets = [0, 48], sizes = [2, 16], strides = [1, 1]} : vector<2x64xf32> to vector<2x16xf32>
    %cst_165 = arith.constant 0.000000e+00 : f32
    %489 = vector.broadcast %cst_165 : f32 to vector<2x16xf32>
    %490 = arith.subf %489, %488 : vector<2x16xf32>
    %491 = math.exp %490 : vector<2x16xf32>
    %cst_166 = arith.constant 1.000000e+00 : f32
    %492 = vector.broadcast %cst_166 : f32 to vector<2x16xf32>
    %493 = arith.addf %492, %491 : vector<2x16xf32>
    %cst_167 = arith.constant 1.000000e+00 : f32
    %494 = vector.broadcast %cst_167 : f32 to vector<2x16xf32>
    %495 = arith.divf %494, %493 : vector<2x16xf32>
    %496 = arith.mulf %485, %428 : vector<2x16xf32>
    %497 = arith.mulf %477, %487 : vector<2x16xf32>
    %498 = arith.addf %496, %497 : vector<2x16xf32>
    %499 = math.tanh %498 : vector<2x16xf32>
    %500 = arith.mulf %495, %499 : vector<2x16xf32>
    %501 = vector.shape_cast %500 : vector<2x16xf32> to vector<2x1x16xf32>
    %c0_168 = arith.constant 0 : index
    %c6 = arith.constant 6 : index
    %c0_169 = arith.constant 0 : index
    %502 = vector.load %arg7[%c0_168, %c6, %c0_169] : memref<2x8x16xf32, #tpu.memory_space<vmem>>, vector<2x1x16xf32>
    tpu.vector_store %arg7[%c0_168, %c6, %c0_169], %501 {strides = array<i32>} : memref<2x8x16xf32, #tpu.memory_space<vmem>>, vector<2x1x16xf32>,
    %cst_170 = arith.constant dense<0.000000e+00> : vector<2x64xf32>
    %503 = tpu.matmul %465, %6, %cst_170 {dimension_numbers = #tpu.dot_dimension_numbers<[1], [0], [0], [1], [0, 0, 1, 1], [], []>} : vector<2x16xf32>, vector<16x64xf32>, vector<2x64xf32> -> vector<2x64xf32>
    %504 = arith.addf %5, %503 : vector<2x64xf32>
    %505 = vector.extract_strided_slice %504 {offsets = [0, 0], sizes = [2, 16], strides = [1, 1]} : vector<2x64xf32> to vector<2x16xf32>
    %cst_171 = arith.constant 0.000000e+00 : f32
    %506 = vector.broadcast %cst_171 : f32 to vector<2x16xf32>
    %507 = arith.subf %506, %505 : vector<2x16xf32>
    %508 = math.exp %507 : vector<2x16xf32>
    %cst_172 = arith.constant 1.000000e+00 : f32
    %509 = vector.broadcast %cst_172 : f32 to vector<2x16xf32>
    %510 = arith.addf %509, %508 : vector<2x16xf32>
    %cst_173 = arith.constant 1.000000e+00 : f32
    %511 = vector.broadcast %cst_173 : f32 to vector<2x16xf32>
    %512 = arith.divf %511, %510 : vector<2x16xf32>
    %513 = vector.extract_strided_slice %504 {offsets = [0, 16], sizes = [2, 16], strides = [1, 1]} : vector<2x64xf32> to vector<2x16xf32>
    %cst_174 = arith.constant 0.000000e+00 : f32
    %514 = vector.broadcast %cst_174 : f32 to vector<2x16xf32>
    %515 = arith.subf %514, %513 : vector<2x16xf32>
    %516 = math.exp %515 : vector<2x16xf32>
    %cst_175 = arith.constant 1.000000e+00 : f32
    %517 = vector.broadcast %cst_175 : f32 to vector<2x16xf32>
    %518 = arith.addf %517, %516 : vector<2x16xf32>
    %cst_176 = arith.constant 1.000000e+00 : f32
    %519 = vector.broadcast %cst_176 : f32 to vector<2x16xf32>
    %520 = arith.divf %519, %518 : vector<2x16xf32>
    %521 = vector.extract_strided_slice %504 {offsets = [0, 32], sizes = [2, 16], strides = [1, 1]} : vector<2x64xf32> to vector<2x16xf32>
    %522 = math.tanh %521 : vector<2x16xf32>
    %523 = vector.extract_strided_slice %504 {offsets = [0, 48], sizes = [2, 16], strides = [1, 1]} : vector<2x64xf32> to vector<2x16xf32>
    %cst_177 = arith.constant 0.000000e+00 : f32
    %524 = vector.broadcast %cst_177 : f32 to vector<2x16xf32>
    %525 = arith.subf %524, %523 : vector<2x16xf32>
    %526 = math.exp %525 : vector<2x16xf32>
    %cst_178 = arith.constant 1.000000e+00 : f32
    %527 = vector.broadcast %cst_178 : f32 to vector<2x16xf32>
    %528 = arith.addf %527, %526 : vector<2x16xf32>
    %cst_179 = arith.constant 1.000000e+00 : f32
    %529 = vector.broadcast %cst_179 : f32 to vector<2x16xf32>
    %530 = arith.divf %529, %528 : vector<2x16xf32>
    %531 = arith.mulf %520, %463 : vector<2x16xf32>
    %532 = arith.mulf %512, %522 : vector<2x16xf32>
    %533 = arith.addf %531, %532 : vector<2x16xf32>
    %534 = math.tanh %533 : vector<2x16xf32>
    %535 = arith.mulf %530, %534 : vector<2x16xf32>
    %536 = tpu.concatenate %535, %500 in 1 : vector<2x16xf32>, vector<2x16xf32> -> vector<2x32xf32>
    %cst_180 = arith.constant dense<0.000000e+00> : vector<2x64xf32>
    %537 = tpu.matmul %536, %7, %cst_180 {dimension_numbers = #tpu.dot_dimension_numbers<[1], [0], [0], [1], [0, 0, 1, 1], [], []>} : vector<2x32xf32>, vector<32x64xf32>, vector<2x64xf32> -> vector<2x64xf32>
    %538 = vector.broadcast %8 : vector<1x64xf32> to vector<2x64xf32>
    %539 = arith.addf %537, %538 : vector<2x64xf32>
    %540 = vector.extract_strided_slice %539 {offsets = [0, 0], sizes = [2, 16], strides = [1, 1]} : vector<2x64xf32> to vector<2x16xf32>
    %cst_181 = arith.constant 0.000000e+00 : f32
    %541 = vector.broadcast %cst_181 : f32 to vector<2x16xf32>
    %542 = arith.subf %541, %540 : vector<2x16xf32>
    %543 = math.exp %542 : vector<2x16xf32>
    %cst_182 = arith.constant 1.000000e+00 : f32
    %544 = vector.broadcast %cst_182 : f32 to vector<2x16xf32>
    %545 = arith.addf %544, %543 : vector<2x16xf32>
    %cst_183 = arith.constant 1.000000e+00 : f32
    %546 = vector.broadcast %cst_183 : f32 to vector<2x16xf32>
    %547 = arith.divf %546, %545 : vector<2x16xf32>
    %548 = vector.extract_strided_slice %539 {offsets = [0, 16], sizes = [2, 16], strides = [1, 1]} : vector<2x64xf32> to vector<2x16xf32>
    %cst_184 = arith.constant 0.000000e+00 : f32
    %549 = vector.broadcast %cst_184 : f32 to vector<2x16xf32>
    %550 = arith.subf %549, %548 : vector<2x16xf32>
    %551 = math.exp %550 : vector<2x16xf32>
    %cst_185 = arith.constant 1.000000e+00 : f32
    %552 = vector.broadcast %cst_185 : f32 to vector<2x16xf32>
    %553 = arith.addf %552, %551 : vector<2x16xf32>
    %cst_186 = arith.constant 1.000000e+00 : f32
    %554 = vector.broadcast %cst_186 : f32 to vector<2x16xf32>
    %555 = arith.divf %554, %553 : vector<2x16xf32>
    %556 = vector.extract_strided_slice %539 {offsets = [0, 32], sizes = [2, 16], strides = [1, 1]} : vector<2x64xf32> to vector<2x16xf32>
    %557 = math.tanh %556 : vector<2x16xf32>
    %558 = vector.extract_strided_slice %539 {offsets = [0, 48], sizes = [2, 16], strides = [1, 1]} : vector<2x64xf32> to vector<2x16xf32>
    %cst_187 = arith.constant 0.000000e+00 : f32
    %559 = vector.broadcast %cst_187 : f32 to vector<2x16xf32>
    %560 = arith.subf %559, %558 : vector<2x16xf32>
    %561 = math.exp %560 : vector<2x16xf32>
    %cst_188 = arith.constant 1.000000e+00 : f32
    %562 = vector.broadcast %cst_188 : f32 to vector<2x16xf32>
    %563 = arith.addf %562, %561 : vector<2x16xf32>
    %cst_189 = arith.constant 1.000000e+00 : f32
    %564 = vector.broadcast %cst_189 : f32 to vector<2x16xf32>
    %565 = arith.divf %564, %563 : vector<2x16xf32>
    %566 = arith.mulf %555, %498 : vector<2x16xf32>
    %567 = arith.mulf %547, %557 : vector<2x16xf32>
    %568 = arith.addf %566, %567 : vector<2x16xf32>
    %569 = math.tanh %568 : vector<2x16xf32>
    %570 = arith.mulf %565, %569 : vector<2x16xf32>
    %571 = vector.shape_cast %570 : vector<2x16xf32> to vector<2x1x16xf32>
    %c0_190 = arith.constant 0 : index
    %c7 = arith.constant 7 : index
    %c0_191 = arith.constant 0 : index
    %572 = vector.load %arg7[%c0_190, %c7, %c0_191] : memref<2x8x16xf32, #tpu.memory_space<vmem>>, vector<2x1x16xf32>
    tpu.vector_store %arg7[%c0_190, %c7, %c0_191], %571 {strides = array<i32>} : memref<2x8x16xf32, #tpu.memory_space<vmem>>, vector<2x1x16xf32>,
    return
  }
  func.func @transform_0(%arg0: i32) -> (i32, i32) {
    %c0_i32 = arith.constant 0 : i32
    %c0_i32_0 = arith.constant 0 : i32
    %c0_i32_1 = arith.constant 0 : i32
    return %c0_i32, %c0_i32_0 : i32, i32
  }
  func.func @transform_1(%arg0: i32) -> (i32, i32) {
    %c0_i32 = arith.constant 0 : i32
    %c0_i32_0 = arith.constant 0 : i32
    %c0_i32_1 = arith.constant 0 : i32
    return %c0_i32, %c0_i32_0 : i32, i32
  }
  func.func @transform_2(%arg0: i32) -> (i32, i32) {
    %c0_i32 = arith.constant 0 : i32
    %c0_i32_0 = arith.constant 0 : i32
    %c0_i32_1 = arith.constant 0 : i32
    return %c0_i32, %c0_i32_0 : i32, i32
  }
  func.func @transform_3(%arg0: i32) -> (i32, i32) {
    %c0_i32 = arith.constant 0 : i32
    %c0_i32_0 = arith.constant 0 : i32
    %c0_i32_1 = arith.constant 0 : i32
    return %c0_i32, %c0_i32_0 : i32, i32
  }
  func.func @transform_4(%arg0: i32) -> (i32, i32) {
    %c0_i32 = arith.constant 0 : i32
    %c0_i32_0 = arith.constant 0 : i32
    %c0_i32_1 = arith.constant 0 : i32
    return %c0_i32, %c0_i32_0 : i32, i32
  }
  func.func @transform_5(%arg0: i32) -> (i32, i32) {
    %c0_i32 = arith.constant 0 : i32
    %c0_i32_0 = arith.constant 0 : i32
    %c0_i32_1 = arith.constant 0 : i32
    return %c0_i32, %c0_i32_0 : i32, i32
  }
  func.func @transform_6(%arg0: i32) -> (i32, i32, i32) {
    %c0_i32 = arith.constant 0 : i32
    %c0_i32_0 = arith.constant 0 : i32
    %c0_i32_1 = arith.constant 0 : i32
    %c0_i32_2 = arith.constant 0 : i32
    return %c0_i32, %c0_i32_0, %c0_i32_1 : i32, i32, i32
  }
}

</mosaic_0001>

<llo_original>
// kernel: decoder_forward_pallas.1
$region0: #{decoder_forward_pallas.1}
  #allocation0 [shape = 'u32[]', space=smem, size = 0x4, offset = 0x4, fixed_abs, tag = 'smem constant byte address 0x4 - core index']
  #allocation1 [shape = 'u32[144,128]{1,0:T(1,128)}', space=vmem, size = 0x12000, scoped, tag = 'internal scratch']
  %s0 = inlined_call_operand.hbm [shape: f32[2,32], index: 0, kind: input, shape index: {}]
  %s1 = inlined_call_operand.hbm [shape: f32[32,64], index: 1, kind: input, shape index: {}]
  %s2 = inlined_call_operand.hbm [shape: f32[16,64], index: 2, kind: input, shape index: {}]
  %s3 = inlined_call_operand.vmem [shape: f32[1,64], index: 3, kind: input, shape index: {}]
  %s4 = inlined_call_operand.hbm [shape: f32[32,64], index: 4, kind: input, shape index: {}]
  %s5 = inlined_call_operand.vmem [shape: f32[1,64], index: 5, kind: input, shape index: {}]
  %s6 = inlined_call_operand.hbm [shape: f32[2,8,16], index: 6, kind: output, shape index: {}]
  %s7 = sld [smem:[#allocation0]]
  $region50: #{decoder_forward_pallas.1} parent=0
    _
  %s9 = ssub.s32 1, %s7
  %s10 = scalar_select 0, %s9, %s7
  $region1: #{decoder_forward_pallas.1} parent=0
    #allocation2 [shape = 'u8[1024]{0}', space=vmem, size = 0x400, scoped, tag = 'input window, operand 0, single buffered']
    #allocation3 [shape = 's32[1]{0}', space=sflag, size = 0x4, scoped, tag = 'scoped memory for decoder_forward_pallas.1']
    #allocation4 [shape = 's32[1]{0}', space=sflag, size = 0x4, scoped, tag = 'scoped memory for decoder_forward_pallas.1']
    #allocation5 [shape = 'u8[16384]{0}', space=vmem, size = 0x4000, scoped, tag = 'input window, operand 1, single buffered']
    #allocation6 [shape = 's32[1]{0}', space=sflag, size = 0x4, scoped, tag = 'scoped memory for decoder_forward_pallas.1']
    #allocation7 [shape = 'u8[8192]{0}', space=vmem, size = 0x2000, scoped, tag = 'input window, operand 2, single buffered']
    #allocation8 [shape = 'u8[16384]{0}', space=vmem, size = 0x4000, scoped, tag = 'input window, operand 4, single buffered']
    #allocation9 [shape = 's32[1]{0}', space=sflag, size = 0x4, scoped, tag = 'scoped memory for decoder_forward_pallas.1']
    #allocation10 [shape = 'u8[8192]{0}', space=vmem, size = 0x2000, scoped, tag = 'output window, operand 0, single buffered']
    %11 = vsyncpa [#allocation3], 0
    %12 = vsyncpa [#allocation6], 0
    %13 = vsyncpa [#allocation9], 0
    %14 = vsyncpa [#allocation4], 0
    // Predicated region
    $region2: #{decoder_forward_pallas.1} parent=1 // pred_check
      _
    $region3: #{decoder_forward_pallas.1} parent=1 // pred_check_branch
      %16 = sbr.rel (0) target = $region5
    $region4: #{decoder_forward_pallas.1} parent=1 // pred_region
      %s18 = ssub.s32 32, 32
      %19 = vsyncadd [#allocation3], %s18
      %s21 = sshll.u32 [#allocation2], 4
      %s22 = int_to_ptr.vmem [resolvable:$true] %s21
      %24 = dma.hbm_to_vmem [thread:$0]  %s0, 32, %s22, [#allocation3]
    $region5: #{decoder_forward_pallas.1} parent=1 // pred_fallthru
      _
    // Predicated region
    $region6: #{decoder_forward_pallas.1} parent=1 // pred_check
      _
    $region7: #{decoder_forward_pallas.1} parent=1 // pred_check_branch
      %26 = sbr.rel (0) target = $region9
    $region8: #{decoder_forward_pallas.1} parent=1 // pred_region
      %s28 = ssub.s32 512, 512
      %29 = vsyncadd [#allocation6], %s28
      %s30 = sshll.u32 [#allocation5], 4
      %s31 = int_to_ptr.vmem [resolvable:$true] %s30
      %36 = dma.hbm_to_vmem [thread:$0]  %s1, 512, %s31, [#allocation6], 128, 128, 8
    $region9: #{decoder_forward_pallas.1} parent=1 // pred_fallthru
      _
    // Predicated region
    $region10: #{decoder_forward_pallas.1} parent=1 // pred_check
      _
    $region11: #{decoder_forward_pallas.1} parent=1 // pred_check_branch
      %38 = sbr.rel (0) target = $region13
    $region12: #{decoder_forward_pallas.1} parent=1 // pred_region
      %s40 = ssub.s32 256, 256
      %41 = vsyncadd [#allocation6], %s40
      %s42 = sshll.u32 [#allocation7], 4
      %s43 = int_to_ptr.vmem [resolvable:$true] %s42
      %48 = dma.hbm_to_vmem [thread:$0]  %s2, 256, %s43, [#allocation6], 128, 128, 8
    $region13: #{decoder_forward_pallas.1} parent=1 // pred_fallthru
      _
    // Predicated region
    $region14: #{decoder_forward_pallas.1} parent=1 // pred_check
      _
    $region15: #{decoder_forward_pallas.1} parent=1 // pred_check_branch
      %50 = sbr.rel (0) target = $region17
    $region16: #{decoder_forward_pallas.1} parent=1 // pred_region
      _
    $region17: #{decoder_forward_pallas.1} parent=1 // pred_fallthru
      _
    // Predicated region
    $region18: #{decoder_forward_pallas.1} parent=1 // pred_check
      _
    $region19: #{decoder_forward_pallas.1} parent=1 // pred_check_branch
      %52 = sbr.rel (0) target = $region21
    $region20: #{decoder_forward_pallas.1} parent=1 // pred_region
      %s54 = ssub.s32 512, 512
      %55 = vsyncadd [#allocation9], %s54
      %s56 = sshll.u32 [#allocation8], 4
      %s57 = int_to_ptr.vmem [resolvable:$true] %s56
      %62 = dma.hbm_to_vmem [thread:$0]  %s4, 512, %s57, [#allocation9], 128, 128, 8
    $region21: #{decoder_forward_pallas.1} parent=1 // pred_fallthru
      _
    // Predicated region
    $region22: #{decoder_forward_pallas.1} parent=1 // pred_check
      _
    $region23: #{decoder_forward_pallas.1} parent=1 // pred_check_branch
      %64 = sbr.rel (0) target = $region25
    $region24: #{decoder_forward_pallas.1} parent=1 // pred_region
      _
    $region25: #{decoder_forward_pallas.1} parent=1 // pred_fallthru
      _
    // Predicated region
    $region26: #{decoder_forward_pallas.1} parent=1 // pred_check
      _
    $region27: #{decoder_forward_pallas.1} parent=1 // pred_check_branch
      %66 = sbr.rel (0) target = $region29
    $region28: #{decoder_forward_pallas.1} parent=1 // pred_region
      %67 = dma.done [#allocation3], 32
    $region29: #{decoder_forward_pallas.1} parent=1 // pred_fallthru
      _
    // Predicated region
    $region30: #{decoder_forward_pallas.1} parent=1 // pred_check
      _
    $region31: #{decoder_forward_pallas.1} parent=1 // pred_check_branch
      %69 = sbr.rel (0) target = $region33
    $region32: #{decoder_forward_pallas.1} parent=1 // pred_region
      %70 = dma.done [#allocation6], 512
    $region33: #{decoder_forward_pallas.1} parent=1 // pred_fallthru
      _
    // Predicated region
    $region34: #{decoder_forward_pallas.1} parent=1 // pred_check
      _
    $region35: #{decoder_forward_pallas.1} parent=1 // pred_check_branch
      %72 = sbr.rel (0) target = $region37
    $region36: #{decoder_forward_pallas.1} parent=1 // pred_region
      %73 = dma.done [#allocation6], 256
    $region37: #{decoder_forward_pallas.1} parent=1 // pred_fallthru
      _
    // Predicated region
    $region38: #{decoder_forward_pallas.1} parent=1 // pred_check
      _
    $region39: #{decoder_forward_pallas.1} parent=1 // pred_check_branch
      %75 = sbr.rel (0) target = $region41
    $region40: #{decoder_forward_pallas.1} parent=1 // pred_region
      %76 = dma.done [#allocation9], 512
    $region41: #{decoder_forward_pallas.1} parent=1 // pred_fallthru
      _
    %v77 = vld [vmem:[#allocation2] sm:$0x3]
    %v78 = vld [vmem:[#allocation5] sm:$0xff]
    %v79 = vld [vmem:[#allocation5 + $0x8] sm:$0xff]
    %v80 = vld [vmem:[#allocation5 + $0x10] sm:$0xff]
    %v81 = vld [vmem:[#allocation5 + $0x18] sm:$0xff]
    %v82 = vld [vmem:[%s3] sm:$0x1]
    %v84 = vlaneseq
    %v85 = vshrl.u32 %v84, 7
    %v86 = vsub.s32 0, %v85
    %v87 = vrot.slane %v82, %v86
    %vm89 = vcmask 261120
    %v91 = vsel %vm89, %v77, 0
    %93 = vmatprep.subr.mxu0 0.0
    %94 = vmatpush1.msra.mxu0 0.0
    %95 = vmatprep.subr.mxu0 0.0
    %96 = vmatpush1.msra.mxu0 0.0
    %97 = vmatprep.subr.mxu0 0.0
    %98 = vmatpush1.msra.mxu0 0.0
    %99 = vmatprep.subr.mxu0 0.0
    %100 = vmatpush1.msra.mxu0 0.0
    %101 = vmatprep.subr.mxu0 0.0
    %102 = vmatpush1.msra.mxu0 0.0
    %103 = vmatprep.subr.mxu0 0.0
    %104 = vmatpush1.msra.mxu0 0.0
    %105 = vmatprep.subr.mxu0 0.0
    %106 = vmatpush1.msra.mxu0 0.0
    %107 = vmatprep.subr.mxu0 0.0
    %108 = vmatpush1.msra.mxu0 0.0
    %109 = vmatprep.subr.mxu0 0.0
    %110 = vmatpush1.msra.mxu0 0.0
    %111 = vmatprep.subr.mxu0 0.0
    %112 = vmatpush1.msra.mxu0 0.0
    %113 = vmatprep.subr.mxu0 0.0
    %114 = vmatpush1.msra.mxu0 0.0
    %115 = vmatprep.subr.mxu0 0.0
    %116 = vmatpush1.msra.mxu0 0.0
    %117 = vmatprep.subr.mxu0 0.0
    %118 = vmatpush1.msra.mxu0 %v81
    %119 = vmatprep.subr.mxu0 0.0
    %120 = vmatpush1.msra.mxu0 %v80
    %121 = vmatprep.subr.mxu0 0.0
    %122 = vmatpush1.msra.mxu0 %v79
    %123 = vmatprep.subr.mxu0 0.0
    %124 = vmatpush1.msra.mxu0 %v78
    %125 = vmatprep.subr.mxu0 0.0
    %126 = vmatpush2.msra.mxu0 0.0
    %127 = vmatprep.subr.mxu0 0.0
    %128 = vmatpush2.msra.mxu0 0.0
    %129 = vmatprep.subr.mxu0 0.0
    %130 = vmatpush2.msra.mxu0 0.0
    %131 = vmatprep.subr.mxu0 0.0
    %132 = vmatpush2.msra.mxu0 0.0
    %133 = vmatprep.subr.mxu0 0.0
    %134 = vmatpush2.msra.mxu0 0.0
    %135 = vmatprep.subr.mxu0 0.0
    %136 = vmatpush2.msra.mxu0 0.0
    %137 = vmatprep.subr.mxu0 0.0
    %138 = vmatpush2.msra.mxu0 0.0
    %139 = vmatprep.subr.mxu0 0.0
    %140 = vmatpush2.msra.mxu0 0.0
    %141 = vmatprep.subr.mxu0 0.0
    %142 = vmatpush2.msra.mxu0 0.0
    %143 = vmatprep.subr.mxu0 0.0
    %144 = vmatpush2.msra.mxu0 0.0
    %145 = vmatprep.subr.mxu0 0.0
    %146 = vmatpush2.msra.mxu0 0.0
    %147 = vmatprep.subr.mxu0 0.0
    %148 = vmatpush2.msra.mxu0 0.0
    %149 = vmatprep.subr.mxu0 0.0
    %150 = vmatpush2.msra.mxu0 0.0
    %151 = vmatprep.subr.mxu0 0.0
    %152 = vmatpush2.msra.mxu0 0.0
    %153 = vmatprep.subr.mxu0 0.0
    %154 = vmatpush2.msra.mxu0 0.0
    %155 = vmatprep.subr.mxu0 0.0
    %156 = vmatpush2.msra.mxu0 0.0
    %157 = vmatprep.mubr.f32.mxu0 0.0
    %158 = vmatmul.mubr.f32.gmra.mxu0 %v91
    %v159 = vpop.f32.mrf.mxu0
    %v160 = vadd.f32 %v87, %v159
    %v161 = vpop.f32.mrf.mxu0
    %162 = vdwg.mxu0
    %v163 = vld [vmem:[#allocation7] sm:$0xff]
    %v164 = vld [vmem:[#allocation7 + $0x8] sm:$0xff]
    %v165 = vld [vmem:[#allocation8] sm:$0xff]
    %v166 = vld [vmem:[#allocation8 + $0x8] sm:$0xff]
    %v167 = vld [vmem:[#allocation8 + $0x10] sm:$0xff]
    %v168 = vld [vmem:[#allocation8 + $0x18] sm:$0xff]
    %v169 = vld [vmem:[%s5] sm:$0x1]
    %vm170 = vcmask 130048
    %v172 = vsel %vm170, 0.0, 0
    %174 = vmatprep.subr.mxu0 0.0
    %175 = vmatpush1.msra.mxu0 0.0
    %176 = vmatprep.subr.mxu0 0.0
    %177 = vmatpush1.msra.mxu0 0.0
    %178 = vmatprep.subr.mxu0 0.0
    %179 = vmatpush1.msra.mxu0 0.0
    %180 = vmatprep.subr.mxu0 0.0
    %181 = vmatpush1.msra.mxu0 0.0
    %182 = vmatprep.subr.mxu0 0.0
    %183 = vmatpush1.msra.mxu0 0.0
    %184 = vmatprep.subr.mxu0 0.0
    %185 = vmatpush1.msra.mxu0 0.0
    %186 = vmatprep.subr.mxu0 0.0
    %187 = vmatpush1.msra.mxu0 0.0
    %188 = vmatprep.subr.mxu0 0.0
    %189 = vmatpush1.msra.mxu0 0.0
    %190 = vmatprep.subr.mxu0 0.0
    %191 = vmatpush1.msra.mxu0 0.0
    %192 = vmatprep.subr.mxu0 0.0
    %193 = vmatpush1.msra.mxu0 0.0
    %194 = vmatprep.subr.mxu0 0.0
    %195 = vmatpush1.msra.mxu0 0.0
    %196 = vmatprep.subr.mxu0 0.0
    %197 = vmatpush1.msra.mxu0 0.0
    %198 = vmatprep.subr.mxu0 0.0
    %199 = vmatpush1.msra.mxu0 0.0
    %200 = vmatprep.subr.mxu0 0.0
    %201 = vmatpush1.msra.mxu0 0.0
    %202 = vmatprep.subr.mxu0 0.0
    %203 = vmatpush1.msra.mxu0 %v164
    %204 = vmatprep.subr.mxu0 0.0
    %205 = vmatpush1.msra.mxu0 %v163
    %206 = vmatprep.subr.mxu0 0.0
    %207 = vmatpush2.msra.mxu0 0.0
    %208 = vmatprep.subr.mxu0 0.0
    %209 = vmatpush2.msra.mxu0 0.0
    %210 = vmatprep.subr.mxu0 0.0
    %211 = vmatpush2.msra.mxu0 0.0
    %212 = vmatprep.subr.mxu0 0.0
    %213 = vmatpush2.msra.mxu0 0.0
    %214 = vmatprep.subr.mxu0 0.0
    %215 = vmatpush2.msra.mxu0 0.0
    %216 = vmatprep.subr.mxu0 0.0
    %217 = vmatpush2.msra.mxu0 0.0
    %218 = vmatprep.subr.mxu0 0.0
    %219 = vmatpush2.msra.mxu0 0.0
    %220 = vmatprep.subr.mxu0 0.0
    %221 = vmatpush2.msra.mxu0 0.0
    %222 = vmatprep.subr.mxu0 0.0
    %223 = vmatpush2.msra.mxu0 0.0
    %224 = vmatprep.subr.mxu0 0.0
    %225 = vmatpush2.msra.mxu0 0.0
    %226 = vmatprep.subr.mxu0 0.0
    %227 = vmatpush2.msra.mxu0 0.0
    %228 = vmatprep.subr.mxu0 0.0
    %229 = vmatpush2.msra.mxu0 0.0
    %230 = vmatprep.subr.mxu0 0.0
    %231 = vmatpush2.msra.mxu0 0.0
    %232 = vmatprep.subr.mxu0 0.0
    %233 = vmatpush2.msra.mxu0 0.0
    %234 = vmatprep.subr.mxu0 0.0
    %235 = vmatpush2.msra.mxu0 0.0
    %236 = vmatprep.subr.mxu0 0.0
    %237 = vmatpush2.msra.mxu0 0.0
    %238 = vmatprep.mubr.f32.mxu0 0.0
    %239 = vmatmul.mubr.f32.gmra.mxu0 %v172
    %v240 = vpop.f32.mrf.mxu0
    %v241 = vadd.f32 0.0, %v240
    %v242 = vpop.f32.mrf.mxu0
    %243 = vdwg.mxu0
    %v244 = vadd.f32 %v160, %v241
    %v245 = vsub.f32 0.0, %v244
    %v246 = vmul.f32 %v245, 1.442695
    %v247 = vpow.pop %v246
    %v248 = vadd.f32 %v247, 1.0
    %v249 = vrcp.pop %v248
    %v250 = vmul.f32 1.0, %v249
    %v251 = vtanh.pop %v244
    %v252 = vmul.f32 %v250, 0.0
    %254 = vrot.lane.b32.xlu0 %v251, 96
    %v255 = vpop.permute.xlu0 %254
    %v257 = vmul.f32 %v250, %v255
    %259 = vrot.lane.b32.xlu0 %v257, 16
    %v260 = vpop.permute.xlu0 %259
    %v262 = vadd.f32 %v252, %v260
    %v263 = vtanh.pop %v262
    %265 = vrot.lane.b32.xlu0 %v263, 32
    %v266 = vpop.permute.xlu0 %265
    %v268 = vmul.f32 %v250, %v266
    %270 = vrot.lane.b32.xlu0 %v268, 80
    %v271 = vpop.permute.xlu0 %270
    %v273 = vsel %vm170, %v271, 0.0
    %v275 = vlaneseq
    %v276 = vshrl.u32 %v275, 7
    %v277 = vsub.s32 0, %v276
    %v278 = vrot.slane %v169, %v277
    %v281 = vsel %vm89, %v273, 0
    %283 = vmatprep.subr.mxu0 0.0
    %284 = vmatpush1.msra.mxu0 0.0
    %285 = vmatprep.subr.mxu0 0.0
    %286 = vmatpush1.msra.mxu0 0.0
    %287 = vmatprep.subr.mxu0 0.0
    %288 = vmatpush1.msra.mxu0 0.0
    %289 = vmatprep.subr.mxu0 0.0
    %290 = vmatpush1.msra.mxu0 0.0
    %291 = vmatprep.subr.mxu0 0.0
    %292 = vmatpush1.msra.mxu0 0.0
    %293 = vmatprep.subr.mxu0 0.0
    %294 = vmatpush1.msra.mxu0 0.0
    %295 = vmatprep.subr.mxu0 0.0
    %296 = vmatpush1.msra.mxu0 0.0
    %297 = vmatprep.subr.mxu0 0.0
    %298 = vmatpush1.msra.mxu0 0.0
    %299 = vmatprep.subr.mxu0 0.0
    %300 = vmatpush1.msra.mxu0 0.0
    %301 = vmatprep.subr.mxu0 0.0
    %302 = vmatpush1.msra.mxu0 0.0
    %303 = vmatprep.subr.mxu0 0.0
    %304 = vmatpush1.msra.mxu0 0.0
    %305 = vmatprep.subr.mxu0 0.0
    %306 = vmatpush1.msra.mxu0 0.0
    %307 = vmatprep.subr.mxu0 0.0
    %308 = vmatpush1.msra.mxu0 %v168
    %309 = vmatprep.subr.mxu0 0.0
    %310 = vmatpush1.msra.mxu0 %v167
    %311 = vmatprep.subr.mxu0 0.0
    %312 = vmatpush1.msra.mxu0 %v166
    %313 = vmatprep.subr.mxu0 0.0
    %314 = vmatpush1.msra.mxu0 %v165
    %315 = vmatprep.subr.mxu0 0.0
    %316 = vmatpush2.msra.mxu0 0.0
    %317 = vmatprep.subr.mxu0 0.0
    %318 = vmatpush2.msra.mxu0 0.0
    %319 = vmatprep.subr.mxu0 0.0
    %320 = vmatpush2.msra.mxu0 0.0
    %321 = vmatprep.subr.mxu0 0.0
    %322 = vmatpush2.msra.mxu0 0.0
    %323 = vmatprep.subr.mxu0 0.0
    %324 = vmatpush2.msra.mxu0 0.0
    %325 = vmatprep.subr.mxu0 0.0
    %326 = vmatpush2.msra.mxu0 0.0
    %327 = vmatprep.subr.mxu0 0.0
    %328 = vmatpush2.msra.mxu0 0.0
    %329 = vmatprep.subr.mxu0 0.0
    %330 = vmatpush2.msra.mxu0 0.0
    %331 = vmatprep.subr.mxu0 0.0
    %332 = vmatpush2.msra.mxu0 0.0
    %333 = vmatprep.subr.mxu0 0.0
    %334 = vmatpush2.msra.mxu0 0.0
    %335 = vmatprep.subr.mxu0 0.0
    %336 = vmatpush2.msra.mxu0 0.0
    %337 = vmatprep.subr.mxu0 0.0
    %338 = vmatpush2.msra.mxu0 0.0
    %339 = vmatprep.subr.mxu0 0.0
    %340 = vmatpush2.msra.mxu0 0.0
    %341 = vmatprep.subr.mxu0 0.0
    %342 = vmatpush2.msra.mxu0 0.0
    %343 = vmatprep.subr.mxu0 0.0
    %344 = vmatpush2.msra.mxu0 0.0
    %345 = vmatprep.subr.mxu0 0.0
    %346 = vmatpush2.msra.mxu0 0.0
    %347 = vmatprep.mubr.f32.mxu0 0.0
    %348 = vmatmul.mubr.f32.gmra.mxu0 %v281
    %v349 = vpop.f32.mrf.mxu0
    %v350 = vadd.f32 %v278, %v349
    %v351 = vpop.f32.mrf.mxu0
    %352 = vdwg.mxu0
    %v353 = vsub.f32 0.0, %v350
    %v354 = vmul.f32 %v353, 1.442695
    %v355 = vpow.pop %v354
    %v356 = vadd.f32 %v355, 1.0
    %v357 = vrcp.pop %v356
    %v358 = vmul.f32 1.0, %v357
    %v359 = vtanh.pop %v350
    %v360 = vmul.f32 %v358, 0.0
    %362 = vrot.lane.b32.xlu0 %v359, 96
    %v363 = vpop.permute.xlu0 %362
    %v365 = vmul.f32 %v358, %v363
    %367 = vrot.lane.b32.xlu0 %v365, 16
    %v368 = vpop.permute.xlu0 %367
    %v370 = vadd.f32 %v360, %v368
    %v371 = vtanh.pop %v370
    %373 = vrot.lane.b32.xlu0 %v371, 32
    %v374 = vpop.permute.xlu0 %373
    %v376 = vmul.f32 %v358, %v374
    %v379 = vunpack.c.l.s4 1966171168
    %v380 = vunpack.c.0.s8 %v379
    %v381 = vlaneseq
    %v382 = vshrl.u32 %v381, 7
    %v383 = vsub.s32 %v380, %v382
    %v384 = vrot.slane %v376, %v383
    %v385 = vcombine.high %v384, %v384
    %v387 = vunpack.c.l.s4 1966171168
    %v388 = vunpack.c.0.s8 %v387
    %v389 = vlaneseq
    %v390 = vshrl.u32 %v389, 7
    %v391 = vsub.s32 %v388, %v390
    %v392 = vrot.slane %v384, %v391
    %v394 = vunpack.c.l.s4 1966171168
    %v395 = vunpack.c.0.s8 %v394
    %v396 = vlaneseq
    %v397 = vshrl.u32 %v396, 7
    %v398 = vsub.s32 %v395, %v397
    %v399 = vrot.slane %v385, %v398
    %v400 = vlaneseq
    %v401 = vshrl.u32 %v400, 7
    %v402 = vsub.s32 0, %v401
    %v403 = vrot.slane %v392, %v402
    %v404 = vlaneseq
    %v405 = vshrl.u32 %v404, 7
    %v406 = vsub.s32 0, %v405
    %v407 = vrot.slane %v399, %v406
    %408 = vrot.lane.b32.xlu0 %v403, 80
    %v409 = vpop.permute.xlu0 %408
    %410 = vrot.lane.b32.xlu0 %v407, 80
    %v411 = vpop.permute.xlu0 %410
    %vm414 = vcmask 122880
    %415 = vst.msk [vmem:[#allocation10] sm:$0x1] %vm414, %v409
    %416 = vst.msk [vmem:[#allocation10 + $0x8] sm:$0x1] %vm414, %v411
    %v417 = vsel %vm170, %v271, 0
    %419 = vmatprep.subr.mxu0 0.0
    %420 = vmatpush1.msra.mxu0 0.0
    %421 = vmatprep.subr.mxu0 0.0
    %422 = vmatpush1.msra.mxu0 0.0
    %423 = vmatprep.subr.mxu0 0.0
    %424 = vmatpush1.msra.mxu0 0.0
    %425 = vmatprep.subr.mxu0 0.0
    %426 = vmatpush1.msra.mxu0 0.0
    %427 = vmatprep.subr.mxu0 0.0
    %428 = vmatpush1.msra.mxu0 0.0
    %429 = vmatprep.subr.mxu0 0.0
    %430 = vmatpush1.msra.mxu0 0.0
    %431 = vmatprep.subr.mxu0 0.0
    %432 = vmatpush1.msra.mxu0 0.0
    %433 = vmatprep.subr.mxu0 0.0
    %434 = vmatpush1.msra.mxu0 0.0
    %435 = vmatprep.subr.mxu0 0.0
    %436 = vmatpush1.msra.mxu0 0.0
    %437 = vmatprep.subr.mxu0 0.0
    %438 = vmatpush1.msra.mxu0 0.0
    %439 = vmatprep.subr.mxu0 0.0
    %440 = vmatpush1.msra.mxu0 0.0
    %441 = vmatprep.subr.mxu0 0.0
    %442 = vmatpush1.msra.mxu0 0.0
    %443 = vmatprep.subr.mxu0 0.0
    %444 = vmatpush1.msra.mxu0 0.0
    %445 = vmatprep.subr.mxu0 0.0
    %446 = vmatpush1.msra.mxu0 0.0
    %447 = vmatprep.subr.mxu0 0.0
    %448 = vmatpush1.msra.mxu0 %v164
    %449 = vmatprep.subr.mxu0 0.0
    %450 = vmatpush1.msra.mxu0 %v163
    %451 = vmatprep.subr.mxu0 0.0
    %452 = vmatpush2.msra.mxu0 0.0
    %453 = vmatprep.subr.mxu0 0.0
    %454 = vmatpush2.msra.mxu0 0.0
    %455 = vmatprep.subr.mxu0 0.0
    %456 = vmatpush2.msra.mxu0 0.0
    %457 = vmatprep.subr.mxu0 0.0
    %458 = vmatpush2.msra.mxu0 0.0
    %459 = vmatprep.subr.mxu0 0.0
    %460 = vmatpush2.msra.mxu0 0.0
    %461 = vmatprep.subr.mxu0 0.0
    %462 = vmatpush2.msra.mxu0 0.0
    %463 = vmatprep.subr.mxu0 0.0
    %464 = vmatpush2.msra.mxu0 0.0
    %465 = vmatprep.subr.mxu0 0.0
    %466 = vmatpush2.msra.mxu0 0.0
    %467 = vmatprep.subr.mxu0 0.0
    %468 = vmatpush2.msra.mxu0 0.0
    %469 = vmatprep.subr.mxu0 0.0
    %470 = vmatpush2.msra.mxu0 0.0
    %471 = vmatprep.subr.mxu0 0.0
    %472 = vmatpush2.msra.mxu0 0.0
    %473 = vmatprep.subr.mxu0 0.0
    %474 = vmatpush2.msra.mxu0 0.0
    %475 = vmatprep.subr.mxu0 0.0
    %476 = vmatpush2.msra.mxu0 0.0
    %477 = vmatprep.subr.mxu0 0.0
    %478 = vmatpush2.msra.mxu0 0.0
    %479 = vmatprep.subr.mxu0 0.0
    %480 = vmatpush2.msra.mxu0 0.0
    %481 = vmatprep.subr.mxu0 0.0
    %482 = vmatpush2.msra.mxu0 0.0
    %483 = vmatprep.mubr.f32.mxu0 0.0
    %484 = vmatmul.mubr.f32.gmra.mxu0 %v417
    %v485 = vpop.f32.mrf.mxu0
    %v486 = vadd.f32 0.0, %v485
    %v487 = vpop.f32.mrf.mxu0
    %488 = vdwg.mxu0
    %v489 = vadd.f32 %v160, %v486
    %v490 = vsub.f32 0.0, %v489
    %v491 = vmul.f32 %v490, 1.442695
    %v492 = vpow.pop %v491
    %v493 = vadd.f32 %v492, 1.0
    %v494 = vrcp.pop %v493
    %v495 = vmul.f32 1.0, %v494
    %v496 = vtanh.pop %v489
    %v497 = vmul.f32 %v495, %v262
    %499 = vrot.lane.b32.xlu0 %v496, 96
    %v500 = vpop.permute.xlu0 %499
    %v502 = vmul.f32 %v495, %v500
    %504 = vrot.lane.b32.xlu0 %v502, 16
    %v505 = vpop.permute.xlu0 %504
    %v507 = vadd.f32 %v497, %v505
    %v508 = vtanh.pop %v507
    %510 = vrot.lane.b32.xlu0 %v508, 32
    %v511 = vpop.permute.xlu0 %510
    %v513 = vmul.f32 %v495, %v511
    %515 = vrot.lane.b32.xlu0 %v513, 80
    %v516 = vpop.permute.xlu0 %515
    %518 = vrot.lane.b32.xlu0 %v376, 96
    %v519 = vpop.permute.xlu0 %518
    %v521 = vsel %vm170, %v516, %v519
    %v523 = vsel %vm89, %v521, 0
    %525 = vmatprep.subr.mxu0 0.0
    %526 = vmatpush1.msra.mxu0 0.0
    %527 = vmatprep.subr.mxu0 0.0
    %528 = vmatpush1.msra.mxu0 0.0
    %529 = vmatprep.subr.mxu0 0.0
    %530 = vmatpush1.msra.mxu0 0.0
    %531 = vmatprep.subr.mxu0 0.0
    %532 = vmatpush1.msra.mxu0 0.0
    %533 = vmatprep.subr.mxu0 0.0
    %534 = vmatpush1.msra.mxu0 0.0
    %535 = vmatprep.subr.mxu0 0.0
    %536 = vmatpush1.msra.mxu0 0.0
    %537 = vmatprep.subr.mxu0 0.0
    %538 = vmatpush1.msra.mxu0 0.0
    %539 = vmatprep.subr.mxu0 0.0
    %540 = vmatpush1.msra.mxu0 0.0
    %541 = vmatprep.subr.mxu0 0.0
    %542 = vmatpush1.msra.mxu0 0.0
    %543 = vmatprep.subr.mxu0 0.0
    %544 = vmatpush1.msra.mxu0 0.0
    %545 = vmatprep.subr.mxu0 0.0
    %546 = vmatpush1.msra.mxu0 0.0
    %547 = vmatprep.subr.mxu0 0.0
    %548 = vmatpush1.msra.mxu0 0.0
    %549 = vmatprep.subr.mxu0 0.0
    %550 = vmatpush1.msra.mxu0 %v168
    %551 = vmatprep.subr.mxu0 0.0
    %552 = vmatpush1.msra.mxu0 %v167
    %553 = vmatprep.subr.mxu0 0.0
    %554 = vmatpush1.msra.mxu0 %v166
    %555 = vmatprep.subr.mxu0 0.0
    %556 = vmatpush1.msra.mxu0 %v165
    %557 = vmatprep.subr.mxu0 0.0
    %558 = vmatpush2.msra.mxu0 0.0
    %559 = vmatprep.subr.mxu0 0.0
    %560 = vmatpush2.msra.mxu0 0.0
    %561 = vmatprep.subr.mxu0 0.0
    %562 = vmatpush2.msra.mxu0 0.0
    %563 = vmatprep.subr.mxu0 0.0
    %564 = vmatpush2.msra.mxu0 0.0
    %565 = vmatprep.subr.mxu0 0.0
    %566 = vmatpush2.msra.mxu0 0.0
    %567 = vmatprep.subr.mxu0 0.0
    %568 = vmatpush2.msra.mxu0 0.0
    %569 = vmatprep.subr.mxu0 0.0
    %570 = vmatpush2.msra.mxu0 0.0
    %571 = vmatprep.subr.mxu0 0.0
    %572 = vmatpush2.msra.mxu0 0.0
    %573 = vmatprep.subr.mxu0 0.0
    %574 = vmatpush2.msra.mxu0 0.0
    %575 = vmatprep.subr.mxu0 0.0
    %576 = vmatpush2.msra.mxu0 0.0
    %577 = vmatprep.subr.mxu0 0.0
    %578 = vmatpush2.msra.mxu0 0.0
    %579 = vmatprep.subr.mxu0 0.0
    %580 = vmatpush2.msra.mxu0 0.0
    %581 = vmatprep.subr.mxu0 0.0
    %582 = vmatpush2.msra.mxu0 0.0
    %583 = vmatprep.subr.mxu0 0.0
    %584 = vmatpush2.msra.mxu0 0.0
    %585 = vmatprep.subr.mxu0 0.0
    %586 = vmatpush2.msra.mxu0 0.0
    %587 = vmatprep.subr.mxu0 0.0
    %588 = vmatpush2.msra.mxu0 0.0
    %589 = vmatprep.mubr.f32.mxu0 0.0
    %590 = vmatmul.mubr.f32.gmra.mxu0 %v523
    %v591 = vpop.f32.mrf.mxu0
    %v592 = vadd.f32 %v278, %v591
    %v593 = vpop.f32.mrf.mxu0
    %594 = vdwg.mxu0
    %v595 = vsub.f32 0.0, %v592
    %v596 = vmul.f32 %v595, 1.442695
    %v597 = vpow.pop %v596
    %v598 = vadd.f32 %v597, 1.0
    %v599 = vrcp.pop %v598
    %v600 = vmul.f32 1.0, %v599
    %v601 = vtanh.pop %v592
    %v602 = vmul.f32 %v600, %v370
    %604 = vrot.lane.b32.xlu0 %v601, 96
    %v605 = vpop.permute.xlu0 %604
    %v607 = vmul.f32 %v600, %v605
    %609 = vrot.lane.b32.xlu0 %v607, 16
    %v610 = vpop.permute.xlu0 %609
    %v612 = vadd.f32 %v602, %v610
    %v613 = vtanh.pop %v612
    %615 = vrot.lane.b32.xlu0 %v613, 32
    %v616 = vpop.permute.xlu0 %615
    %v618 = vmul.f32 %v600, %v616
    %v621 = vunpack.c.l.s4 1966171168
    %v622 = vunpack.c.0.s8 %v621
    %v623 = vlaneseq
    %v624 = vshrl.u32 %v623, 7
    %v625 = vsub.s32 %v622, %v624
    %v626 = vrot.slane %v618, %v625
    %v627 = vcombine.high %v626, %v626
    %v629 = vunpack.c.l.s4 1966171168
    %v630 = vunpack.c.0.s8 %v629
    %v631 = vlaneseq
    %v632 = vshrl.u32 %v631, 7
    %v633 = vsub.s32 %v630, %v632
    %v634 = vrot.slane %v626, %v633
    %v636 = vunpack.c.l.s4 1966171168
    %v637 = vunpack.c.0.s8 %v636
    %v638 = vlaneseq
    %v639 = vshrl.u32 %v638, 7
    %v640 = vsub.s32 %v637, %v639
    %v641 = vrot.slane %v627, %v640
    %v642 = vlaneseq
    %v643 = vshrl.u32 %v642, 7
    %v644 = vsub.s32 0, %v643
    %v645 = vrot.slane %v634, %v644
    %v646 = vlaneseq
    %v647 = vshrl.u32 %v646, 7
    %v648 = vsub.s32 0, %v647
    %v649 = vrot.slane %v641, %v648
    %650 = vrot.lane.b32.xlu0 %v645, 80
    %v651 = vpop.permute.xlu0 %650
    %652 = vrot.lane.b32.xlu0 %v649, 80
    %v653 = vpop.permute.xlu0 %652
    %656 = vst.msk [vmem:[#allocation10 + $0x1] sm:$0x1] %vm414, %v651
    %657 = vst.msk [vmem:[#allocation10 + $0x9] sm:$0x1] %vm414, %v653
    %v658 = vsel %vm170, %v516, 0
    %660 = vmatprep.subr.mxu0 0.0
    %661 = vmatpush1.msra.mxu0 0.0
    %662 = vmatprep.subr.mxu0 0.0
    %663 = vmatpush1.msra.mxu0 0.0
    %664 = vmatprep.subr.mxu0 0.0
    %665 = vmatpush1.msra.mxu0 0.0
    %666 = vmatprep.subr.mxu0 0.0
    %667 = vmatpush1.msra.mxu0 0.0
    %668 = vmatprep.subr.mxu0 0.0
    %669 = vmatpush1.msra.mxu0 0.0
    %670 = vmatprep.subr.mxu0 0.0
    %671 = vmatpush1.msra.mxu0 0.0
    %672 = vmatprep.subr.mxu0 0.0
    %673 = vmatpush1.msra.mxu0 0.0
    %674 = vmatprep.subr.mxu0 0.0
    %675 = vmatpush1.msra.mxu0 0.0
    %676 = vmatprep.subr.mxu0 0.0
    %677 = vmatpush1.msra.mxu0 0.0
    %678 = vmatprep.subr.mxu0 0.0
    %679 = vmatpush1.msra.mxu0 0.0
    %680 = vmatprep.subr.mxu0 0.0
    %681 = vmatpush1.msra.mxu0 0.0
    %682 = vmatprep.subr.mxu0 0.0
    %683 = vmatpush1.msra.mxu0 0.0
    %684 = vmatprep.subr.mxu0 0.0
    %685 = vmatpush1.msra.mxu0 0.0
    %686 = vmatprep.subr.mxu0 0.0
    %687 = vmatpush1.msra.mxu0 0.0
    %688 = vmatprep.subr.mxu0 0.0
    %689 = vmatpush1.msra.mxu0 %v164
    %690 = vmatprep.subr.mxu0 0.0
    %691 = vmatpush1.msra.mxu0 %v163
    %692 = vmatprep.subr.mxu0 0.0
    %693 = vmatpush2.msra.mxu0 0.0
    %694 = vmatprep.subr.mxu0 0.0
    %695 = vmatpush2.msra.mxu0 0.0
    %696 = vmatprep.subr.mxu0 0.0
    %697 = vmatpush2.msra.mxu0 0.0
    %698 = vmatprep.subr.mxu0 0.0
    %699 = vmatpush2.msra.mxu0 0.0
    %700 = vmatprep.subr.mxu0 0.0
    %701 = vmatpush2.msra.mxu0 0.0
    %702 = vmatprep.subr.mxu0 0.0
    %703 = vmatpush2.msra.mxu0 0.0
    %704 = vmatprep.subr.mxu0 0.0
    %705 = vmatpush2.msra.mxu0 0.0
    %706 = vmatprep.subr.mxu0 0.0
    %707 = vmatpush2.msra.mxu0 0.0
    %708 = vmatprep.subr.mxu0 0.0
    %709 = vmatpush2.msra.mxu0 0.0
    %710 = vmatprep.subr.mxu0 0.0
    %711 = vmatpush2.msra.mxu0 0.0
    %712 = vmatprep.subr.mxu0 0.0
    %713 = vmatpush2.msra.mxu0 0.0
    %714 = vmatprep.subr.mxu0 0.0
    %715 = vmatpush2.msra.mxu0 0.0
    %716 = vmatprep.subr.mxu0 0.0
    %717 = vmatpush2.msra.mxu0 0.0
    %718 = vmatprep.subr.mxu0 0.0
    %719 = vmatpush2.msra.mxu0 0.0
    %720 = vmatprep.subr.mxu0 0.0
    %721 = vmatpush2.msra.mxu0 0.0
    %722 = vmatprep.subr.mxu0 0.0
    %723 = vmatpush2.msra.mxu0 0.0
    %724 = vmatprep.mubr.f32.mxu0 0.0
    %725 = vmatmul.mubr.f32.gmra.mxu0 %v658
    %v726 = vpop.f32.mrf.mxu0
    %v727 = vadd.f32 0.0, %v726
    %v728 = vpop.f32.mrf.mxu0
    %729 = vdwg.mxu0
    %v730 = vadd.f32 %v160, %v727
    %v731 = vsub.f32 0.0, %v730
    %v732 = vmul.f32 %v731, 1.442695
    %v733 = vpow.pop %v732
    %v734 = vadd.f32 %v733, 1.0
    %v735 = vrcp.pop %v734
    %v736 = vmul.f32 1.0, %v735
    %v737 = vtanh.pop %v730
    %v738 = vmul.f32 %v736, %v507
    %740 = vrot.lane.b32.xlu0 %v737, 96
    %v741 = vpop.permute.xlu0 %740
    %v743 = vmul.f32 %v736, %v741
    %745 = vrot.lane.b32.xlu0 %v743, 16
    %v746 = vpop.permute.xlu0 %745
    %v748 = vadd.f32 %v738, %v746
    %v749 = vtanh.pop %v748
    %751 = vrot.lane.b32.xlu0 %v749, 32
    %v752 = vpop.permute.xlu0 %751
    %v754 = vmul.f32 %v736, %v752
    %756 = vrot.lane.b32.xlu0 %v754, 80
    %v757 = vpop.permute.xlu0 %756
    %759 = vrot.lane.b32.xlu0 %v618, 96
    %v760 = vpop.permute.xlu0 %759
    %v762 = vsel %vm170, %v757, %v760
    %v764 = vsel %vm89, %v762, 0
    %766 = vmatprep.subr.mxu0 0.0
    %767 = vmatpush1.msra.mxu0 0.0
    %768 = vmatprep.subr.mxu0 0.0
    %769 = vmatpush1.msra.mxu0 0.0
    %770 = vmatprep.subr.mxu0 0.0
    %771 = vmatpush1.msra.mxu0 0.0
    %772 = vmatprep.subr.mxu0 0.0
    %773 = vmatpush1.msra.mxu0 0.0
    %774 = vmatprep.subr.mxu0 0.0
    %775 = vmatpush1.msra.mxu0 0.0
    %776 = vmatprep.subr.mxu0 0.0
    %777 = vmatpush1.msra.mxu0 0.0
    %778 = vmatprep.subr.mxu0 0.0
    %779 = vmatpush1.msra.mxu0 0.0
    %780 = vmatprep.subr.mxu0 0.0
    %781 = vmatpush1.msra.mxu0 0.0
    %782 = vmatprep.subr.mxu0 0.0
    %783 = vmatpush1.msra.mxu0 0.0
    %784 = vmatprep.subr.mxu0 0.0
    %785 = vmatpush1.msra.mxu0 0.0
    %786 = vmatprep.subr.mxu0 0.0
    %787 = vmatpush1.msra.mxu0 0.0
    %788 = vmatprep.subr.mxu0 0.0
    %789 = vmatpush1.msra.mxu0 0.0
    %790 = vmatprep.subr.mxu0 0.0
    %791 = vmatpush1.msra.mxu0 %v168
    %792 = vmatprep.subr.mxu0 0.0
    %793 = vmatpush1.msra.mxu0 %v167
    %794 = vmatprep.subr.mxu0 0.0
    %795 = vmatpush1.msra.mxu0 %v166
    %796 = vmatprep.subr.mxu0 0.0
    %797 = vmatpush1.msra.mxu0 %v165
    %798 = vmatprep.subr.mxu0 0.0
    %799 = vmatpush2.msra.mxu0 0.0
    %800 = vmatprep.subr.mxu0 0.0
    %801 = vmatpush2.msra.mxu0 0.0
    %802 = vmatprep.subr.mxu0 0.0
    %803 = vmatpush2.msra.mxu0 0.0
    %804 = vmatprep.subr.mxu0 0.0
    %805 = vmatpush2.msra.mxu0 0.0
    %806 = vmatprep.subr.mxu0 0.0
    %807 = vmatpush2.msra.mxu0 0.0
    %808 = vmatprep.subr.mxu0 0.0
    %809 = vmatpush2.msra.mxu0 0.0
    %810 = vmatprep.subr.mxu0 0.0
    %811 = vmatpush2.msra.mxu0 0.0
    %812 = vmatprep.subr.mxu0 0.0
    %813 = vmatpush2.msra.mxu0 0.0
    %814 = vmatprep.subr.mxu0 0.0
    %815 = vmatpush2.msra.mxu0 0.0
    %816 = vmatprep.subr.mxu0 0.0
    %817 = vmatpush2.msra.mxu0 0.0
    %818 = vmatprep.subr.mxu0 0.0
    %819 = vmatpush2.msra.mxu0 0.0
    %820 = vmatprep.subr.mxu0 0.0
    %821 = vmatpush2.msra.mxu0 0.0
    %822 = vmatprep.subr.mxu0 0.0
    %823 = vmatpush2.msra.mxu0 0.0
    %824 = vmatprep.subr.mxu0 0.0
    %825 = vmatpush2.msra.mxu0 0.0
    %826 = vmatprep.subr.mxu0 0.0
    %827 = vmatpush2.msra.mxu0 0.0
    %828 = vmatprep.subr.mxu0 0.0
    %829 = vmatpush2.msra.mxu0 0.0
    %830 = vmatprep.mubr.f32.mxu0 0.0
    %831 = vmatmul.mubr.f32.gmra.mxu0 %v764
    %v832 = vpop.f32.mrf.mxu0
    %v833 = vadd.f32 %v278, %v832
    %v834 = vpop.f32.mrf.mxu0
    %835 = vdwg.mxu0
    %v836 = vsub.f32 0.0, %v833
    %v837 = vmul.f32 %v836, 1.442695
    %v838 = vpow.pop %v837
    %v839 = vadd.f32 %v838, 1.0
    %v840 = vrcp.pop %v839
    %v841 = vmul.f32 1.0, %v840
    %v842 = vtanh.pop %v833
    %v843 = vmul.f32 %v841, %v612
    %845 = vrot.lane.b32.xlu0 %v842, 96
    %v846 = vpop.permute.xlu0 %845
    %v848 = vmul.f32 %v841, %v846
    %850 = vrot.lane.b32.xlu0 %v848, 16
    %v851 = vpop.permute.xlu0 %850
    %v853 = vadd.f32 %v843, %v851
    %v854 = vtanh.pop %v853
    %856 = vrot.lane.b32.xlu0 %v854, 32
    %v857 = vpop.permute.xlu0 %856
    %v859 = vmul.f32 %v841, %v857
    %v862 = vunpack.c.l.s4 1966171168
    %v863 = vunpack.c.0.s8 %v862
    %v864 = vlaneseq
    %v865 = vshrl.u32 %v864, 7
    %v866 = vsub.s32 %v863, %v865
    %v867 = vrot.slane %v859, %v866
    %v868 = vcombine.high %v867, %v867
    %v870 = vunpack.c.l.s4 1966171168
    %v871 = vunpack.c.0.s8 %v870
    %v872 = vlaneseq
    %v873 = vshrl.u32 %v872, 7
    %v874 = vsub.s32 %v871, %v873
    %v875 = vrot.slane %v867, %v874
    %v877 = vunpack.c.l.s4 1966171168
    %v878 = vunpack.c.0.s8 %v877
    %v879 = vlaneseq
    %v880 = vshrl.u32 %v879, 7
    %v881 = vsub.s32 %v878, %v880
    %v882 = vrot.slane %v868, %v881
    %v883 = vlaneseq
    %v884 = vshrl.u32 %v883, 7
    %v885 = vsub.s32 0, %v884
    %v886 = vrot.slane %v875, %v885
    %v887 = vlaneseq
    %v888 = vshrl.u32 %v887, 7
    %v889 = vsub.s32 0, %v888
    %v890 = vrot.slane %v882, %v889
    %891 = vrot.lane.b32.xlu0 %v886, 80
    %v892 = vpop.permute.xlu0 %891
    %893 = vrot.lane.b32.xlu0 %v890, 80
    %v894 = vpop.permute.xlu0 %893
    %897 = vst.msk [vmem:[#allocation10 + $0x2] sm:$0x1] %vm414, %v892
    %898 = vst.msk [vmem:[#allocation10 + $0xa] sm:$0x1] %vm414, %v894
    %v899 = vsel %vm170, %v757, 0
    %901 = vmatprep.subr.mxu0 0.0
    %902 = vmatpush1.msra.mxu0 0.0
    %903 = vmatprep.subr.mxu0 0.0
    %904 = vmatpush1.msra.mxu0 0.0
    %905 = vmatprep.subr.mxu0 0.0
    %906 = vmatpush1.msra.mxu0 0.0
    %907 = vmatprep.subr.mxu0 0.0
    %908 = vmatpush1.msra.mxu0 0.0
    %909 = vmatprep.subr.mxu0 0.0
    %910 = vmatpush1.msra.mxu0 0.0
    %911 = vmatprep.subr.mxu0 0.0
    %912 = vmatpush1.msra.mxu0 0.0
    %913 = vmatprep.subr.mxu0 0.0
    %914 = vmatpush1.msra.mxu0 0.0
    %915 = vmatprep.subr.mxu0 0.0
    %916 = vmatpush1.msra.mxu0 0.0
    %917 = vmatprep.subr.mxu0 0.0
    %918 = vmatpush1.msra.mxu0 0.0
    %919 = vmatprep.subr.mxu0 0.0
    %920 = vmatpush1.msra.mxu0 0.0
    %921 = vmatprep.subr.mxu0 0.0
    %922 = vmatpush1.msra.mxu0 0.0
    %923 = vmatprep.subr.mxu0 0.0
    %924 = vmatpush1.msra.mxu0 0.0
    %925 = vmatprep.subr.mxu0 0.0
    %926 = vmatpush1.msra.mxu0 0.0
    %927 = vmatprep.subr.mxu0 0.0
    %928 = vmatpush1.msra.mxu0 0.0
    %929 = vmatprep.subr.mxu0 0.0
    %930 = vmatpush1.msra.mxu0 %v164
    %931 = vmatprep.subr.mxu0 0.0
    %932 = vmatpush1.msra.mxu0 %v163
    %933 = vmatprep.subr.mxu0 0.0
    %934 = vmatpush2.msra.mxu0 0.0
    %935 = vmatprep.subr.mxu0 0.0
    %936 = vmatpush2.msra.mxu0 0.0
    %937 = vmatprep.subr.mxu0 0.0
    %938 = vmatpush2.msra.mxu0 0.0
    %939 = vmatprep.subr.mxu0 0.0
    %940 = vmatpush2.msra.mxu0 0.0
    %941 = vmatprep.subr.mxu0 0.0
    %942 = vmatpush2.msra.mxu0 0.0
    %943 = vmatprep.subr.mxu0 0.0
    %944 = vmatpush2.msra.mxu0 0.0
    %945 = vmatprep.subr.mxu0 0.0
    %946 = vmatpush2.msra.mxu0 0.0
    %947 = vmatprep.subr.mxu0 0.0
    %948 = vmatpush2.msra.mxu0 0.0
    %949 = vmatprep.subr.mxu0 0.0
    %950 = vmatpush2.msra.mxu0 0.0
    %951 = vmatprep.subr.mxu0 0.0
    %952 = vmatpush2.msra.mxu0 0.0
    %953 = vmatprep.subr.mxu0 0.0
    %954 = vmatpush2.msra.mxu0 0.0
    %955 = vmatprep.subr.mxu0 0.0
    %956 = vmatpush2.msra.mxu0 0.0
    %957 = vmatprep.subr.mxu0 0.0
    %958 = vmatpush2.msra.mxu0 0.0
    %959 = vmatprep.subr.mxu0 0.0
    %960 = vmatpush2.msra.mxu0 0.0
    %961 = vmatprep.subr.mxu0 0.0
    %962 = vmatpush2.msra.mxu0 0.0
    %963 = vmatprep.subr.mxu0 0.0
    %964 = vmatpush2.msra.mxu0 0.0
    %965 = vmatprep.mubr.f32.mxu0 0.0
    %966 = vmatmul.mubr.f32.gmra.mxu0 %v899
    %v967 = vpop.f32.mrf.mxu0
    %v968 = vadd.f32 0.0, %v967
    %v969 = vpop.f32.mrf.mxu0
    %970 = vdwg.mxu0
    %v971 = vadd.f32 %v160, %v968
    %v972 = vsub.f32 0.0, %v971
    %v973 = vmul.f32 %v972, 1.442695
    %v974 = vpow.pop %v973
    %v975 = vadd.f32 %v974, 1.0
    %v976 = vrcp.pop %v975
    %v977 = vmul.f32 1.0, %v976
    %v978 = vtanh.pop %v971
    %v979 = vmul.f32 %v977, %v748
    %981 = vrot.lane.b32.xlu0 %v978, 96
    %v982 = vpop.permute.xlu0 %981
    %v984 = vmul.f32 %v977, %v982
    %986 = vrot.lane.b32.xlu0 %v984, 16
    %v987 = vpop.permute.xlu0 %986
    %v989 = vadd.f32 %v979, %v987
    %v990 = vtanh.pop %v989
    %992 = vrot.lane.b32.xlu0 %v990, 32
    %v993 = vpop.permute.xlu0 %992
    %v995 = vmul.f32 %v977, %v993
    %997 = vrot.lane.b32.xlu0 %v995, 80
    %v998 = vpop.permute.xlu0 %997
    %1000 = vrot.lane.b32.xlu0 %v859, 96
    %v1001 = vpop.permute.xlu0 %1000
    %v1003 = vsel %vm170, %v998, %v1001
    %v1005 = vsel %vm89, %v1003, 0
    %1007 = vmatprep.subr.mxu0 0.0
    %1008 = vmatpush1.msra.mxu0 0.0
    %1009 = vmatprep.subr.mxu0 0.0
    %1010 = vmatpush1.msra.mxu0 0.0
    %1011 = vmatprep.subr.mxu0 0.0
    %1012 = vmatpush1.msra.mxu0 0.0
    %1013 = vmatprep.subr.mxu0 0.0
    %1014 = vmatpush1.msra.mxu0 0.0
    %1015 = vmatprep.subr.mxu0 0.0
    %1016 = vmatpush1.msra.mxu0 0.0
    %1017 = vmatprep.subr.mxu0 0.0
    %1018 = vmatpush1.msra.mxu0 0.0
    %1019 = vmatprep.subr.mxu0 0.0
    %1020 = vmatpush1.msra.mxu0 0.0
    %1021 = vmatprep.subr.mxu0 0.0
    %1022 = vmatpush1.msra.mxu0 0.0
    %1023 = vmatprep.subr.mxu0 0.0
    %1024 = vmatpush1.msra.mxu0 0.0
    %1025 = vmatprep.subr.mxu0 0.0
    %1026 = vmatpush1.msra.mxu0 0.0
    %1027 = vmatprep.subr.mxu0 0.0
    %1028 = vmatpush1.msra.mxu0 0.0
    %1029 = vmatprep.subr.mxu0 0.0
    %1030 = vmatpush1.msra.mxu0 0.0
    %1031 = vmatprep.subr.mxu0 0.0
    %1032 = vmatpush1.msra.mxu0 %v168
    %1033 = vmatprep.subr.mxu0 0.0
    %1034 = vmatpush1.msra.mxu0 %v167
    %1035 = vmatprep.subr.mxu0 0.0
    %1036 = vmatpush1.msra.mxu0 %v166
    %1037 = vmatprep.subr.mxu0 0.0
    %1038 = vmatpush1.msra.mxu0 %v165
    %1039 = vmatprep.subr.mxu0 0.0
    %1040 = vmatpush2.msra.mxu0 0.0
    %1041 = vmatprep.subr.mxu0 0.0
    %1042 = vmatpush2.msra.mxu0 0.0
    %1043 = vmatprep.subr.mxu0 0.0
    %1044 = vmatpush2.msra.mxu0 0.0
    %1045 = vmatprep.subr.mxu0 0.0
    %1046 = vmatpush2.msra.mxu0 0.0
    %1047 = vmatprep.subr.mxu0 0.0
    %1048 = vmatpush2.msra.mxu0 0.0
    %1049 = vmatprep.subr.mxu0 0.0
    %1050 = vmatpush2.msra.mxu0 0.0
    %1051 = vmatprep.subr.mxu0 0.0
    %1052 = vmatpush2.msra.mxu0 0.0
    %1053 = vmatprep.subr.mxu0 0.0
    %1054 = vmatpush2.msra.mxu0 0.0
    %1055 = vmatprep.subr.mxu0 0.0
    %1056 = vmatpush2.msra.mxu0 0.0
    %1057 = vmatprep.subr.mxu0 0.0
    %1058 = vmatpush2.msra.mxu0 0.0
    %1059 = vmatprep.subr.mxu0 0.0
    %1060 = vmatpush2.msra.mxu0 0.0
    %1061 = vmatprep.subr.mxu0 0.0
    %1062 = vmatpush2.msra.mxu0 0.0
    %1063 = vmatprep.subr.mxu0 0.0
    %1064 = vmatpush2.msra.mxu0 0.0
    %1065 = vmatprep.subr.mxu0 0.0
    %1066 = vmatpush2.msra.mxu0 0.0
    %1067 = vmatprep.subr.mxu0 0.0
    %1068 = vmatpush2.msra.mxu0 0.0
    %1069 = vmatprep.subr.mxu0 0.0
    %1070 = vmatpush2.msra.mxu0 0.0
    %1071 = vmatprep.mubr.f32.mxu0 0.0
    %1072 = vmatmul.mubr.f32.gmra.mxu0 %v1005
    %v1073 = vpop.f32.mrf.mxu0
    %v1074 = vadd.f32 %v278, %v1073
    %v1075 = vpop.f32.mrf.mxu0
    %1076 = vdwg.mxu0
    %v1077 = vsub.f32 0.0, %v1074
    %v1078 = vmul.f32 %v1077, 1.442695
    %v1079 = vpow.pop %v1078
    %v1080 = vadd.f32 %v1079, 1.0
    %v1081 = vrcp.pop %v1080
    %v1082 = vmul.f32 1.0, %v1081
    %v1083 = vtanh.pop %v1074
    %v1084 = vmul.f32 %v1082, %v853
    %1086 = vrot.lane.b32.xlu0 %v1083, 96
    %v1087 = vpop.permute.xlu0 %1086
    %v1089 = vmul.f32 %v1082, %v1087
    %1091 = vrot.lane.b32.xlu0 %v1089, 16
    %v1092 = vpop.permute.xlu0 %1091
    %v1094 = vadd.f32 %v1084, %v1092
    %v1095 = vtanh.pop %v1094
    %1097 = vrot.lane.b32.xlu0 %v1095, 32
    %v1098 = vpop.permute.xlu0 %1097
    %v1100 = vmul.f32 %v1082, %v1098
    %v1103 = vunpack.c.l.s4 1966171168
    %v1104 = vunpack.c.0.s8 %v1103
    %v1105 = vlaneseq
    %v1106 = vshrl.u32 %v1105, 7
    %v1107 = vsub.s32 %v1104, %v1106
    %v1108 = vrot.slane %v1100, %v1107
    %v1109 = vcombine.high %v1108, %v1108
    %v1111 = vunpack.c.l.s4 1966171168
    %v1112 = vunpack.c.0.s8 %v1111
    %v1113 = vlaneseq
    %v1114 = vshrl.u32 %v1113, 7
    %v1115 = vsub.s32 %v1112, %v1114
    %v1116 = vrot.slane %v1108, %v1115
    %v1118 = vunpack.c.l.s4 1966171168
    %v1119 = vunpack.c.0.s8 %v1118
    %v1120 = vlaneseq
    %v1121 = vshrl.u32 %v1120, 7
    %v1122 = vsub.s32 %v1119, %v1121
    %v1123 = vrot.slane %v1109, %v1122
    %v1124 = vlaneseq
    %v1125 = vshrl.u32 %v1124, 7
    %v1126 = vsub.s32 0, %v1125
    %v1127 = vrot.slane %v1116, %v1126
    %v1128 = vlaneseq
    %v1129 = vshrl.u32 %v1128, 7
    %v1130 = vsub.s32 0, %v1129
    %v1131 = vrot.slane %v1123, %v1130
    %1132 = vrot.lane.b32.xlu0 %v1127, 80
    %v1133 = vpop.permute.xlu0 %1132
    %1134 = vrot.lane.b32.xlu0 %v1131, 80
    %v1135 = vpop.permute.xlu0 %1134
    %1138 = vst.msk [vmem:[#allocation10 + $0x3] sm:$0x1] %vm414, %v1133
    %1139 = vst.msk [vmem:[#allocation10 + $0xb] sm:$0x1] %vm414, %v1135
    %v1140 = vsel %vm170, %v998, 0
    %1142 = vmatprep.subr.mxu0 0.0
    %1143 = vmatpush1.msra.mxu0 0.0
    %1144 = vmatprep.subr.mxu0 0.0
    %1145 = vmatpush1.msra.mxu0 0.0
    %1146 = vmatprep.subr.mxu0 0.0
    %1147 = vmatpush1.msra.mxu0 0.0
    %1148 = vmatprep.subr.mxu0 0.0
    %1149 = vmatpush1.msra.mxu0 0.0
    %1150 = vmatprep.subr.mxu0 0.0
    %1151 = vmatpush1.msra.mxu0 0.0
    %1152 = vmatprep.subr.mxu0 0.0
    %1153 = vmatpush1.msra.mxu0 0.0
    %1154 = vmatprep.subr.mxu0 0.0
    %1155 = vmatpush1.msra.mxu0 0.0
    %1156 = vmatprep.subr.mxu0 0.0
    %1157 = vmatpush1.msra.mxu0 0.0
    %1158 = vmatprep.subr.mxu0 0.0
    %1159 = vmatpush1.msra.mxu0 0.0
    %1160 = vmatprep.subr.mxu0 0.0
    %1161 = vmatpush1.msra.mxu0 0.0
    %1162 = vmatprep.subr.mxu0 0.0
    %1163 = vmatpush1.msra.mxu0 0.0
    %1164 = vmatprep.subr.mxu0 0.0
    %1165 = vmatpush1.msra.mxu0 0.0
    %1166 = vmatprep.subr.mxu0 0.0
    %1167 = vmatpush1.msra.mxu0 0.0
    %1168 = vmatprep.subr.mxu0 0.0
    %1169 = vmatpush1.msra.mxu0 0.0
    %1170 = vmatprep.subr.mxu0 0.0
    %1171 = vmatpush1.msra.mxu0 %v164
    %1172 = vmatprep.subr.mxu0 0.0
    %1173 = vmatpush1.msra.mxu0 %v163
    %1174 = vmatprep.subr.mxu0 0.0
    %1175 = vmatpush2.msra.mxu0 0.0
    %1176 = vmatprep.subr.mxu0 0.0
    %1177 = vmatpush2.msra.mxu0 0.0
    %1178 = vmatprep.subr.mxu0 0.0
    %1179 = vmatpush2.msra.mxu0 0.0
    %1180 = vmatprep.subr.mxu0 0.0
    %1181 = vmatpush2.msra.mxu0 0.0
    %1182 = vmatprep.subr.mxu0 0.0
    %1183 = vmatpush2.msra.mxu0 0.0
    %1184 = vmatprep.subr.mxu0 0.0
    %1185 = vmatpush2.msra.mxu0 0.0
    %1186 = vmatprep.subr.mxu0 0.0
    %1187 = vmatpush2.msra.mxu0 0.0
    %1188 = vmatprep.subr.mxu0 0.0
    %1189 = vmatpush2.msra.mxu0 0.0
    %1190 = vmatprep.subr.mxu0 0.0
    %1191 = vmatpush2.msra.mxu0 0.0
    %1192 = vmatprep.subr.mxu0 0.0
    %1193 = vmatpush2.msra.mxu0 0.0
    %1194 = vmatprep.subr.mxu0 0.0
    %1195 = vmatpush2.msra.mxu0 0.0
    %1196 = vmatprep.subr.mxu0 0.0
    %1197 = vmatpush2.msra.mxu0 0.0
    %1198 = vmatprep.subr.mxu0 0.0
    %1199 = vmatpush2.msra.mxu0 0.0
    %1200 = vmatprep.subr.mxu0 0.0
    %1201 = vmatpush2.msra.mxu0 0.0
    %1202 = vmatprep.subr.mxu0 0.0
    %1203 = vmatpush2.msra.mxu0 0.0
    %1204 = vmatprep.subr.mxu0 0.0
    %1205 = vmatpush2.msra.mxu0 0.0
    %1206 = vmatprep.mubr.f32.mxu0 0.0
    %1207 = vmatmul.mubr.f32.gmra.mxu0 %v1140
    %v1208 = vpop.f32.mrf.mxu0
    %v1209 = vadd.f32 0.0, %v1208
    %v1210 = vpop.f32.mrf.mxu0
    %1211 = vdwg.mxu0
    %v1212 = vadd.f32 %v160, %v1209
    %v1213 = vsub.f32 0.0, %v1212
    %v1214 = vmul.f32 %v1213, 1.442695
    %v1215 = vpow.pop %v1214
    %v1216 = vadd.f32 %v1215, 1.0
    %v1217 = vrcp.pop %v1216
    %v1218 = vmul.f32 1.0, %v1217
    %v1219 = vtanh.pop %v1212
    %v1220 = vmul.f32 %v1218, %v989
    %1222 = vrot.lane.b32.xlu0 %v1219, 96
    %v1223 = vpop.permute.xlu0 %1222
    %v1225 = vmul.f32 %v1218, %v1223
    %1227 = vrot.lane.b32.xlu0 %v1225, 16
    %v1228 = vpop.permute.xlu0 %1227
    %v1230 = vadd.f32 %v1220, %v1228
    %v1231 = vtanh.pop %v1230
    %1233 = vrot.lane.b32.xlu0 %v1231, 32
    %v1234 = vpop.permute.xlu0 %1233
    %v1236 = vmul.f32 %v1218, %v1234
    %1238 = vrot.lane.b32.xlu0 %v1236, 80
    %v1239 = vpop.permute.xlu0 %1238
    %1241 = vrot.lane.b32.xlu0 %v1100, 96
    %v1242 = vpop.permute.xlu0 %1241
    %v1244 = vsel %vm170, %v1239, %v1242
    %v1246 = vsel %vm89, %v1244, 0
    %1248 = vmatprep.subr.mxu0 0.0
    %1249 = vmatpush1.msra.mxu0 0.0
    %1250 = vmatprep.subr.mxu0 0.0
    %1251 = vmatpush1.msra.mxu0 0.0
    %1252 = vmatprep.subr.mxu0 0.0
    %1253 = vmatpush1.msra.mxu0 0.0
    %1254 = vmatprep.subr.mxu0 0.0
    %1255 = vmatpush1.msra.mxu0 0.0
    %1256 = vmatprep.subr.mxu0 0.0
    %1257 = vmatpush1.msra.mxu0 0.0
    %1258 = vmatprep.subr.mxu0 0.0
    %1259 = vmatpush1.msra.mxu0 0.0
    %1260 = vmatprep.subr.mxu0 0.0
    %1261 = vmatpush1.msra.mxu0 0.0
    %1262 = vmatprep.subr.mxu0 0.0
    %1263 = vmatpush1.msra.mxu0 0.0
    %1264 = vmatprep.subr.mxu0 0.0
    %1265 = vmatpush1.msra.mxu0 0.0
    %1266 = vmatprep.subr.mxu0 0.0
    %1267 = vmatpush1.msra.mxu0 0.0
    %1268 = vmatprep.subr.mxu0 0.0
    %1269 = vmatpush1.msra.mxu0 0.0
    %1270 = vmatprep.subr.mxu0 0.0
    %1271 = vmatpush1.msra.mxu0 0.0
    %1272 = vmatprep.subr.mxu0 0.0
    %1273 = vmatpush1.msra.mxu0 %v168
    %1274 = vmatprep.subr.mxu0 0.0
    %1275 = vmatpush1.msra.mxu0 %v167
    %1276 = vmatprep.subr.mxu0 0.0
    %1277 = vmatpush1.msra.mxu0 %v166
    %1278 = vmatprep.subr.mxu0 0.0
    %1279 = vmatpush1.msra.mxu0 %v165
    %1280 = vmatprep.subr.mxu0 0.0
    %1281 = vmatpush2.msra.mxu0 0.0
    %1282 = vmatprep.subr.mxu0 0.0
    %1283 = vmatpush2.msra.mxu0 0.0
    %1284 = vmatprep.subr.mxu0 0.0
    %1285 = vmatpush2.msra.mxu0 0.0
    %1286 = vmatprep.subr.mxu0 0.0
    %1287 = vmatpush2.msra.mxu0 0.0
    %1288 = vmatprep.subr.mxu0 0.0
    %1289 = vmatpush2.msra.mxu0 0.0
    %1290 = vmatprep.subr.mxu0 0.0
    %1291 = vmatpush2.msra.mxu0 0.0
    %1292 = vmatprep.subr.mxu0 0.0
    %1293 = vmatpush2.msra.mxu0 0.0
    %1294 = vmatprep.subr.mxu0 0.0
    %1295 = vmatpush2.msra.mxu0 0.0
    %1296 = vmatprep.subr.mxu0 0.0
    %1297 = vmatpush2.msra.mxu0 0.0
    %1298 = vmatprep.subr.mxu0 0.0
    %1299 = vmatpush2.msra.mxu0 0.0
    %1300 = vmatprep.subr.mxu0 0.0
    %1301 = vmatpush2.msra.mxu0 0.0
    %1302 = vmatprep.subr.mxu0 0.0
    %1303 = vmatpush2.msra.mxu0 0.0
    %1304 = vmatprep.subr.mxu0 0.0
    %1305 = vmatpush2.msra.mxu0 0.0
    %1306 = vmatprep.subr.mxu0 0.0
    %1307 = vmatpush2.msra.mxu0 0.0
    %1308 = vmatprep.subr.mxu0 0.0
    %1309 = vmatpush2.msra.mxu0 0.0
    %1310 = vmatprep.subr.mxu0 0.0
    %1311 = vmatpush2.msra.mxu0 0.0
    %1312 = vmatprep.mubr.f32.mxu0 0.0
    %1313 = vmatmul.mubr.f32.gmra.mxu0 %v1246
    %v1314 = vpop.f32.mrf.mxu0
    %v1315 = vadd.f32 %v278, %v1314
    %v1316 = vpop.f32.mrf.mxu0
    %1317 = vdwg.mxu0
    %v1318 = vsub.f32 0.0, %v1315
    %v1319 = vmul.f32 %v1318, 1.442695
    %v1320 = vpow.pop %v1319
    %v1321 = vadd.f32 %v1320, 1.0
    %v1322 = vrcp.pop %v1321
    %v1323 = vmul.f32 1.0, %v1322
    %v1324 = vtanh.pop %v1315
    %v1325 = vmul.f32 %v1323, %v1094
    %1327 = vrot.lane.b32.xlu0 %v1324, 96
    %v1328 = vpop.permute.xlu0 %1327
    %v1330 = vmul.f32 %v1323, %v1328
    %1332 = vrot.lane.b32.xlu0 %v1330, 16
    %v1333 = vpop.permute.xlu0 %1332
    %v1335 = vadd.f32 %v1325, %v1333
    %v1336 = vtanh.pop %v1335
    %1338 = vrot.lane.b32.xlu0 %v1336, 32
    %v1339 = vpop.permute.xlu0 %1338
    %v1341 = vmul.f32 %v1323, %v1339
    %v1344 = vunpack.c.l.s4 1966171168
    %v1345 = vunpack.c.0.s8 %v1344
    %v1346 = vlaneseq
    %v1347 = vshrl.u32 %v1346, 7
    %v1348 = vsub.s32 %v1345, %v1347
    %v1349 = vrot.slane %v1341, %v1348
    %v1350 = vcombine.high %v1349, %v1349
    %v1352 = vunpack.c.l.s4 1966171168
    %v1353 = vunpack.c.0.s8 %v1352
    %v1354 = vlaneseq
    %v1355 = vshrl.u32 %v1354, 7
    %v1356 = vsub.s32 %v1353, %v1355
    %v1357 = vrot.slane %v1349, %v1356
    %v1359 = vunpack.c.l.s4 1966171168
    %v1360 = vunpack.c.0.s8 %v1359
    %v1361 = vlaneseq
    %v1362 = vshrl.u32 %v1361, 7
    %v1363 = vsub.s32 %v1360, %v1362
    %v1364 = vrot.slane %v1350, %v1363
    %v1365 = vlaneseq
    %v1366 = vshrl.u32 %v1365, 7
    %v1367 = vsub.s32 0, %v1366
    %v1368 = vrot.slane %v1357, %v1367
    %v1369 = vlaneseq
    %v1370 = vshrl.u32 %v1369, 7
    %v1371 = vsub.s32 0, %v1370
    %v1372 = vrot.slane %v1364, %v1371
    %1373 = vrot.lane.b32.xlu0 %v1368, 80
    %v1374 = vpop.permute.xlu0 %1373
    %1375 = vrot.lane.b32.xlu0 %v1372, 80
    %v1376 = vpop.permute.xlu0 %1375
    %1379 = vst.msk [vmem:[#allocation10 + $0x4] sm:$0x1] %vm414, %v1374
    %1380 = vst.msk [vmem:[#allocation10 + $0xc] sm:$0x1] %vm414, %v1376
    %v1381 = vsel %vm170, %v1239, 0
    %1383 = vmatprep.subr.mxu0 0.0
    %1384 = vmatpush1.msra.mxu0 0.0
    %1385 = vmatprep.subr.mxu0 0.0
    %1386 = vmatpush1.msra.mxu0 0.0
    %1387 = vmatprep.subr.mxu0 0.0
    %1388 = vmatpush1.msra.mxu0 0.0
    %1389 = vmatprep.subr.mxu0 0.0
    %1390 = vmatpush1.msra.mxu0 0.0
    %1391 = vmatprep.subr.mxu0 0.0
    %1392 = vmatpush1.msra.mxu0 0.0
    %1393 = vmatprep.subr.mxu0 0.0
    %1394 = vmatpush1.msra.mxu0 0.0
    %1395 = vmatprep.subr.mxu0 0.0
    %1396 = vmatpush1.msra.mxu0 0.0
    %1397 = vmatprep.subr.mxu0 0.0
    %1398 = vmatpush1.msra.mxu0 0.0
    %1399 = vmatprep.subr.mxu0 0.0
    %1400 = vmatpush1.msra.mxu0 0.0
    %1401 = vmatprep.subr.mxu0 0.0
    %1402 = vmatpush1.msra.mxu0 0.0
    %1403 = vmatprep.subr.mxu0 0.0
    %1404 = vmatpush1.msra.mxu0 0.0
    %1405 = vmatprep.subr.mxu0 0.0
    %1406 = vmatpush1.msra.mxu0 0.0
    %1407 = vmatprep.subr.mxu0 0.0
    %1408 = vmatpush1.msra.mxu0 0.0
    %1409 = vmatprep.subr.mxu0 0.0
    %1410 = vmatpush1.msra.mxu0 0.0
    %1411 = vmatprep.subr.mxu0 0.0
    %1412 = vmatpush1.msra.mxu0 %v164
    %1413 = vmatprep.subr.mxu0 0.0
    %1414 = vmatpush1.msra.mxu0 %v163
    %1415 = vmatprep.subr.mxu0 0.0
    %1416 = vmatpush2.msra.mxu0 0.0
    %1417 = vmatprep.subr.mxu0 0.0
    %1418 = vmatpush2.msra.mxu0 0.0
    %1419 = vmatprep.subr.mxu0 0.0
    %1420 = vmatpush2.msra.mxu0 0.0
    %1421 = vmatprep.subr.mxu0 0.0
    %1422 = vmatpush2.msra.mxu0 0.0
    %1423 = vmatprep.subr.mxu0 0.0
    %1424 = vmatpush2.msra.mxu0 0.0
    %1425 = vmatprep.subr.mxu0 0.0
    %1426 = vmatpush2.msra.mxu0 0.0
    %1427 = vmatprep.subr.mxu0 0.0
    %1428 = vmatpush2.msra.mxu0 0.0
    %1429 = vmatprep.subr.mxu0 0.0
    %1430 = vmatpush2.msra.mxu0 0.0
    %1431 = vmatprep.subr.mxu0 0.0
    %1432 = vmatpush2.msra.mxu0 0.0
    %1433 = vmatprep.subr.mxu0 0.0
    %1434 = vmatpush2.msra.mxu0 0.0
    %1435 = vmatprep.subr.mxu0 0.0
    %1436 = vmatpush2.msra.mxu0 0.0
    %1437 = vmatprep.subr.mxu0 0.0
    %1438 = vmatpush2.msra.mxu0 0.0
    %1439 = vmatprep.subr.mxu0 0.0
    %1440 = vmatpush2.msra.mxu0 0.0
    %1441 = vmatprep.subr.mxu0 0.0
    %1442 = vmatpush2.msra.mxu0 0.0
    %1443 = vmatprep.subr.mxu0 0.0
    %1444 = vmatpush2.msra.mxu0 0.0
    %1445 = vmatprep.subr.mxu0 0.0
    %1446 = vmatpush2.msra.mxu0 0.0
    %1447 = vmatprep.mubr.f32.mxu0 0.0
    %1448 = vmatmul.mubr.f32.gmra.mxu0 %v1381
    %v1449 = vpop.f32.mrf.mxu0
    %v1450 = vadd.f32 0.0, %v1449
    %v1451 = vpop.f32.mrf.mxu0
    %1452 = vdwg.mxu0
    %v1453 = vadd.f32 %v160, %v1450
    %v1454 = vsub.f32 0.0, %v1453
    %v1455 = vmul.f32 %v1454, 1.442695
    %v1456 = vpow.pop %v1455
    %v1457 = vadd.f32 %v1456, 1.0
    %v1458 = vrcp.pop %v1457
    %v1459 = vmul.f32 1.0, %v1458
    %v1460 = vtanh.pop %v1453
    %v1461 = vmul.f32 %v1459, %v1230
    %1463 = vrot.lane.b32.xlu0 %v1460, 96
    %v1464 = vpop.permute.xlu0 %1463
    %v1466 = vmul.f32 %v1459, %v1464
    %1468 = vrot.lane.b32.xlu0 %v1466, 16
    %v1469 = vpop.permute.xlu0 %1468
    %v1471 = vadd.f32 %v1461, %v1469
    %v1472 = vtanh.pop %v1471
    %1474 = vrot.lane.b32.xlu0 %v1472, 32
    %v1475 = vpop.permute.xlu0 %1474
    %v1477 = vmul.f32 %v1459, %v1475
    %1479 = vrot.lane.b32.xlu0 %v1477, 80
    %v1480 = vpop.permute.xlu0 %1479
    %1482 = vrot.lane.b32.xlu0 %v1341, 96
    %v1483 = vpop.permute.xlu0 %1482
    %v1485 = vsel %vm170, %v1480, %v1483
    %v1487 = vsel %vm89, %v1485, 0
    %1489 = vmatprep.subr.mxu0 0.0
    %1490 = vmatpush1.msra.mxu0 0.0
    %1491 = vmatprep.subr.mxu0 0.0
    %1492 = vmatpush1.msra.mxu0 0.0
    %1493 = vmatprep.subr.mxu0 0.0
    %1494 = vmatpush1.msra.mxu0 0.0
    %1495 = vmatprep.subr.mxu0 0.0
    %1496 = vmatpush1.msra.mxu0 0.0
    %1497 = vmatprep.subr.mxu0 0.0
    %1498 = vmatpush1.msra.mxu0 0.0
    %1499 = vmatprep.subr.mxu0 0.0
    %1500 = vmatpush1.msra.mxu0 0.0
    %1501 = vmatprep.subr.mxu0 0.0
    %1502 = vmatpush1.msra.mxu0 0.0
    %1503 = vmatprep.subr.mxu0 0.0
    %1504 = vmatpush1.msra.mxu0 0.0
    %1505 = vmatprep.subr.mxu0 0.0
    %1506 = vmatpush1.msra.mxu0 0.0
    %1507 = vmatprep.subr.mxu0 0.0
    %1508 = vmatpush1.msra.mxu0 0.0
    %1509 = vmatprep.subr.mxu0 0.0
    %1510 = vmatpush1.msra.mxu0 0.0
    %1511 = vmatprep.subr.mxu0 0.0
    %1512 = vmatpush1.msra.mxu0 0.0
    %1513 = vmatprep.subr.mxu0 0.0
    %1514 = vmatpush1.msra.mxu0 %v168
    %1515 = vmatprep.subr.mxu0 0.0
    %1516 = vmatpush1.msra.mxu0 %v167
    %1517 = vmatprep.subr.mxu0 0.0
    %1518 = vmatpush1.msra.mxu0 %v166
    %1519 = vmatprep.subr.mxu0 0.0
    %1520 = vmatpush1.msra.mxu0 %v165
    %1521 = vmatprep.subr.mxu0 0.0
    %1522 = vmatpush2.msra.mxu0 0.0
    %1523 = vmatprep.subr.mxu0 0.0
    %1524 = vmatpush2.msra.mxu0 0.0
    %1525 = vmatprep.subr.mxu0 0.0
    %1526 = vmatpush2.msra.mxu0 0.0
    %1527 = vmatprep.subr.mxu0 0.0
    %1528 = vmatpush2.msra.mxu0 0.0
    %1529 = vmatprep.subr.mxu0 0.0
    %1530 = vmatpush2.msra.mxu0 0.0
    %1531 = vmatprep.subr.mxu0 0.0
    %1532 = vmatpush2.msra.mxu0 0.0
    %1533 = vmatprep.subr.mxu0 0.0
    %1534 = vmatpush2.msra.mxu0 0.0
    %1535 = vmatprep.subr.mxu0 0.0
    %1536 = vmatpush2.msra.mxu0 0.0
    %1537 = vmatprep.subr.mxu0 0.0
    %1538 = vmatpush2.msra.mxu0 0.0
    %1539 = vmatprep.subr.mxu0 0.0
    %1540 = vmatpush2.msra.mxu0 0.0
    %1541 = vmatprep.subr.mxu0 0.0
    %1542 = vmatpush2.msra.mxu0 0.0
    %1543 = vmatprep.subr.mxu0 0.0
    %1544 = vmatpush2.msra.mxu0 0.0
    %1545 = vmatprep.subr.mxu0 0.0
    %1546 = vmatpush2.msra.mxu0 0.0
    %1547 = vmatprep.subr.mxu0 0.0
    %1548 = vmatpush2.msra.mxu0 0.0
    %1549 = vmatprep.subr.mxu0 0.0
    %1550 = vmatpush2.msra.mxu0 0.0
    %1551 = vmatprep.subr.mxu0 0.0
    %1552 = vmatpush2.msra.mxu0 0.0
    %1553 = vmatprep.mubr.f32.mxu0 0.0
    %1554 = vmatmul.mubr.f32.gmra.mxu0 %v1487
    %v1555 = vpop.f32.mrf.mxu0
    %v1556 = vadd.f32 %v278, %v1555
    %v1557 = vpop.f32.mrf.mxu0
    %1558 = vdwg.mxu0
    %v1559 = vsub.f32 0.0, %v1556
    %v1560 = vmul.f32 %v1559, 1.442695
    %v1561 = vpow.pop %v1560
    %v1562 = vadd.f32 %v1561, 1.0
    %v1563 = vrcp.pop %v1562
    %v1564 = vmul.f32 1.0, %v1563
    %v1565 = vtanh.pop %v1556
    %v1566 = vmul.f32 %v1564, %v1335
    %1568 = vrot.lane.b32.xlu0 %v1565, 96
    %v1569 = vpop.permute.xlu0 %1568
    %v1571 = vmul.f32 %v1564, %v1569
    %1573 = vrot.lane.b32.xlu0 %v1571, 16
    %v1574 = vpop.permute.xlu0 %1573
    %v1576 = vadd.f32 %v1566, %v1574
    %v1577 = vtanh.pop %v1576
    %1579 = vrot.lane.b32.xlu0 %v1577, 32
    %v1580 = vpop.permute.xlu0 %1579
    %v1582 = vmul.f32 %v1564, %v1580
    %v1585 = vunpack.c.l.s4 1966171168
    %v1586 = vunpack.c.0.s8 %v1585
    %v1587 = vlaneseq
    %v1588 = vshrl.u32 %v1587, 7
    %v1589 = vsub.s32 %v1586, %v1588
    %v1590 = vrot.slane %v1582, %v1589
    %v1591 = vcombine.high %v1590, %v1590
    %v1593 = vunpack.c.l.s4 1966171168
    %v1594 = vunpack.c.0.s8 %v1593
    %v1595 = vlaneseq
    %v1596 = vshrl.u32 %v1595, 7
    %v1597 = vsub.s32 %v1594, %v1596
    %v1598 = vrot.slane %v1590, %v1597
    %v1600 = vunpack.c.l.s4 1966171168
    %v1601 = vunpack.c.0.s8 %v1600
    %v1602 = vlaneseq
    %v1603 = vshrl.u32 %v1602, 7
    %v1604 = vsub.s32 %v1601, %v1603
    %v1605 = vrot.slane %v1591, %v1604
    %v1606 = vlaneseq
    %v1607 = vshrl.u32 %v1606, 7
    %v1608 = vsub.s32 0, %v1607
    %v1609 = vrot.slane %v1598, %v1608
    %v1610 = vlaneseq
    %v1611 = vshrl.u32 %v1610, 7
    %v1612 = vsub.s32 0, %v1611
    %v1613 = vrot.slane %v1605, %v1612
    %1614 = vrot.lane.b32.xlu0 %v1609, 80
    %v1615 = vpop.permute.xlu0 %1614
    %1616 = vrot.lane.b32.xlu0 %v1613, 80
    %v1617 = vpop.permute.xlu0 %1616
    %1620 = vst.msk [vmem:[#allocation10 + $0x5] sm:$0x1] %vm414, %v1615
    %1621 = vst.msk [vmem:[#allocation10 + $0xd] sm:$0x1] %vm414, %v1617
    %v1622 = vsel %vm170, %v1480, 0
    %1624 = vmatprep.subr.mxu0 0.0
    %1625 = vmatpush1.msra.mxu0 0.0
    %1626 = vmatprep.subr.mxu0 0.0
    %1627 = vmatpush1.msra.mxu0 0.0
    %1628 = vmatprep.subr.mxu0 0.0
    %1629 = vmatpush1.msra.mxu0 0.0
    %1630 = vmatprep.subr.mxu0 0.0
    %1631 = vmatpush1.msra.mxu0 0.0
    %1632 = vmatprep.subr.mxu0 0.0
    %1633 = vmatpush1.msra.mxu0 0.0
    %1634 = vmatprep.subr.mxu0 0.0
    %1635 = vmatpush1.msra.mxu0 0.0
    %1636 = vmatprep.subr.mxu0 0.0
    %1637 = vmatpush1.msra.mxu0 0.0
    %1638 = vmatprep.subr.mxu0 0.0
    %1639 = vmatpush1.msra.mxu0 0.0
    %1640 = vmatprep.subr.mxu0 0.0
    %1641 = vmatpush1.msra.mxu0 0.0
    %1642 = vmatprep.subr.mxu0 0.0
    %1643 = vmatpush1.msra.mxu0 0.0
    %1644 = vmatprep.subr.mxu0 0.0
    %1645 = vmatpush1.msra.mxu0 0.0
    %1646 = vmatprep.subr.mxu0 0.0
    %1647 = vmatpush1.msra.mxu0 0.0
    %1648 = vmatprep.subr.mxu0 0.0
    %1649 = vmatpush1.msra.mxu0 0.0
    %1650 = vmatprep.subr.mxu0 0.0
    %1651 = vmatpush1.msra.mxu0 0.0
    %1652 = vmatprep.subr.mxu0 0.0
    %1653 = vmatpush1.msra.mxu0 %v164
    %1654 = vmatprep.subr.mxu0 0.0
    %1655 = vmatpush1.msra.mxu0 %v163
    %1656 = vmatprep.subr.mxu0 0.0
    %1657 = vmatpush2.msra.mxu0 0.0
    %1658 = vmatprep.subr.mxu0 0.0
    %1659 = vmatpush2.msra.mxu0 0.0
    %1660 = vmatprep.subr.mxu0 0.0
    %1661 = vmatpush2.msra.mxu0 0.0
    %1662 = vmatprep.subr.mxu0 0.0
    %1663 = vmatpush2.msra.mxu0 0.0
    %1664 = vmatprep.subr.mxu0 0.0
    %1665 = vmatpush2.msra.mxu0 0.0
    %1666 = vmatprep.subr.mxu0 0.0
    %1667 = vmatpush2.msra.mxu0 0.0
    %1668 = vmatprep.subr.mxu0 0.0
    %1669 = vmatpush2.msra.mxu0 0.0
    %1670 = vmatprep.subr.mxu0 0.0
    %1671 = vmatpush2.msra.mxu0 0.0
    %1672 = vmatprep.subr.mxu0 0.0
    %1673 = vmatpush2.msra.mxu0 0.0
    %1674 = vmatprep.subr.mxu0 0.0
    %1675 = vmatpush2.msra.mxu0 0.0
    %1676 = vmatprep.subr.mxu0 0.0
    %1677 = vmatpush2.msra.mxu0 0.0
    %1678 = vmatprep.subr.mxu0 0.0
    %1679 = vmatpush2.msra.mxu0 0.0
    %1680 = vmatprep.subr.mxu0 0.0
    %1681 = vmatpush2.msra.mxu0 0.0
    %1682 = vmatprep.subr.mxu0 0.0
    %1683 = vmatpush2.msra.mxu0 0.0
    %1684 = vmatprep.subr.mxu0 0.0
    %1685 = vmatpush2.msra.mxu0 0.0
    %1686 = vmatprep.subr.mxu0 0.0
    %1687 = vmatpush2.msra.mxu0 0.0
    %1688 = vmatprep.mubr.f32.mxu0 0.0
    %1689 = vmatmul.mubr.f32.gmra.mxu0 %v1622
    %v1690 = vpop.f32.mrf.mxu0
    %v1691 = vadd.f32 0.0, %v1690
    %v1692 = vpop.f32.mrf.mxu0
    %1693 = vdwg.mxu0
    %v1694 = vadd.f32 %v160, %v1691
    %v1695 = vsub.f32 0.0, %v1694
    %v1696 = vmul.f32 %v1695, 1.442695
    %v1697 = vpow.pop %v1696
    %v1698 = vadd.f32 %v1697, 1.0
    %v1699 = vrcp.pop %v1698
    %v1700 = vmul.f32 1.0, %v1699
    %v1701 = vtanh.pop %v1694
    %v1702 = vmul.f32 %v1700, %v1471
    %1704 = vrot.lane.b32.xlu0 %v1701, 96
    %v1705 = vpop.permute.xlu0 %1704
    %v1707 = vmul.f32 %v1700, %v1705
    %1709 = vrot.lane.b32.xlu0 %v1707, 16
    %v1710 = vpop.permute.xlu0 %1709
    %v1712 = vadd.f32 %v1702, %v1710
    %v1713 = vtanh.pop %v1712
    %1715 = vrot.lane.b32.xlu0 %v1713, 32
    %v1716 = vpop.permute.xlu0 %1715
    %v1718 = vmul.f32 %v1700, %v1716
    %1720 = vrot.lane.b32.xlu0 %v1718, 80
    %v1721 = vpop.permute.xlu0 %1720
    %1723 = vrot.lane.b32.xlu0 %v1582, 96
    %v1724 = vpop.permute.xlu0 %1723
    %v1726 = vsel %vm170, %v1721, %v1724
    %v1728 = vsel %vm89, %v1726, 0
    %1730 = vmatprep.subr.mxu0 0.0
    %1731 = vmatpush1.msra.mxu0 0.0
    %1732 = vmatprep.subr.mxu0 0.0
    %1733 = vmatpush1.msra.mxu0 0.0
    %1734 = vmatprep.subr.mxu0 0.0
    %1735 = vmatpush1.msra.mxu0 0.0
    %1736 = vmatprep.subr.mxu0 0.0
    %1737 = vmatpush1.msra.mxu0 0.0
    %1738 = vmatprep.subr.mxu0 0.0
    %1739 = vmatpush1.msra.mxu0 0.0
    %1740 = vmatprep.subr.mxu0 0.0
    %1741 = vmatpush1.msra.mxu0 0.0
    %1742 = vmatprep.subr.mxu0 0.0
    %1743 = vmatpush1.msra.mxu0 0.0
    %1744 = vmatprep.subr.mxu0 0.0
    %1745 = vmatpush1.msra.mxu0 0.0
    %1746 = vmatprep.subr.mxu0 0.0
    %1747 = vmatpush1.msra.mxu0 0.0
    %1748 = vmatprep.subr.mxu0 0.0
    %1749 = vmatpush1.msra.mxu0 0.0
    %1750 = vmatprep.subr.mxu0 0.0
    %1751 = vmatpush1.msra.mxu0 0.0
    %1752 = vmatprep.subr.mxu0 0.0
    %1753 = vmatpush1.msra.mxu0 0.0
    %1754 = vmatprep.subr.mxu0 0.0
    %1755 = vmatpush1.msra.mxu0 %v168
    %1756 = vmatprep.subr.mxu0 0.0
    %1757 = vmatpush1.msra.mxu0 %v167
    %1758 = vmatprep.subr.mxu0 0.0
    %1759 = vmatpush1.msra.mxu0 %v166
    %1760 = vmatprep.subr.mxu0 0.0
    %1761 = vmatpush1.msra.mxu0 %v165
    %1762 = vmatprep.subr.mxu0 0.0
    %1763 = vmatpush2.msra.mxu0 0.0
    %1764 = vmatprep.subr.mxu0 0.0
    %1765 = vmatpush2.msra.mxu0 0.0
    %1766 = vmatprep.subr.mxu0 0.0
    %1767 = vmatpush2.msra.mxu0 0.0
    %1768 = vmatprep.subr.mxu0 0.0
    %1769 = vmatpush2.msra.mxu0 0.0
    %1770 = vmatprep.subr.mxu0 0.0
    %1771 = vmatpush2.msra.mxu0 0.0
    %1772 = vmatprep.subr.mxu0 0.0
    %1773 = vmatpush2.msra.mxu0 0.0
    %1774 = vmatprep.subr.mxu0 0.0
    %1775 = vmatpush2.msra.mxu0 0.0
    %1776 = vmatprep.subr.mxu0 0.0
    %1777 = vmatpush2.msra.mxu0 0.0
    %1778 = vmatprep.subr.mxu0 0.0
    %1779 = vmatpush2.msra.mxu0 0.0
    %1780 = vmatprep.subr.mxu0 0.0
    %1781 = vmatpush2.msra.mxu0 0.0
    %1782 = vmatprep.subr.mxu0 0.0
    %1783 = vmatpush2.msra.mxu0 0.0
    %1784 = vmatprep.subr.mxu0 0.0
    %1785 = vmatpush2.msra.mxu0 0.0
    %1786 = vmatprep.subr.mxu0 0.0
    %1787 = vmatpush2.msra.mxu0 0.0
    %1788 = vmatprep.subr.mxu0 0.0
    %1789 = vmatpush2.msra.mxu0 0.0
    %1790 = vmatprep.subr.mxu0 0.0
    %1791 = vmatpush2.msra.mxu0 0.0
    %1792 = vmatprep.subr.mxu0 0.0
    %1793 = vmatpush2.msra.mxu0 0.0
    %1794 = vmatprep.mubr.f32.mxu0 0.0
    %1795 = vmatmul.mubr.f32.gmra.mxu0 %v1728
    %v1796 = vpop.f32.mrf.mxu0
    %v1797 = vadd.f32 %v278, %v1796
    %v1798 = vpop.f32.mrf.mxu0
    %1799 = vdwg.mxu0
    %v1800 = vsub.f32 0.0, %v1797
    %v1801 = vmul.f32 %v1800, 1.442695
    %v1802 = vpow.pop %v1801
    %v1803 = vadd.f32 %v1802, 1.0
    %v1804 = vrcp.pop %v1803
    %v1805 = vmul.f32 1.0, %v1804
    %v1806 = vtanh.pop %v1797
    %v1807 = vmul.f32 %v1805, %v1576
    %1809 = vrot.lane.b32.xlu0 %v1806, 96
    %v1810 = vpop.permute.xlu0 %1809
    %v1812 = vmul.f32 %v1805, %v1810
    %1814 = vrot.lane.b32.xlu0 %v1812, 16
    %v1815 = vpop.permute.xlu0 %1814
    %v1817 = vadd.f32 %v1807, %v1815
    %v1818 = vtanh.pop %v1817
    %1820 = vrot.lane.b32.xlu0 %v1818, 32
    %v1821 = vpop.permute.xlu0 %1820
    %v1823 = vmul.f32 %v1805, %v1821
    %v1826 = vunpack.c.l.s4 1966171168
    %v1827 = vunpack.c.0.s8 %v1826
    %v1828 = vlaneseq
    %v1829 = vshrl.u32 %v1828, 7
    %v1830 = vsub.s32 %v1827, %v1829
    %v1831 = vrot.slane %v1823, %v1830
    %v1832 = vcombine.high %v1831, %v1831
    %v1834 = vunpack.c.l.s4 1966171168
    %v1835 = vunpack.c.0.s8 %v1834
    %v1836 = vlaneseq
    %v1837 = vshrl.u32 %v1836, 7
    %v1838 = vsub.s32 %v1835, %v1837
    %v1839 = vrot.slane %v1831, %v1838
    %v1841 = vunpack.c.l.s4 1966171168
    %v1842 = vunpack.c.0.s8 %v1841
    %v1843 = vlaneseq
    %v1844 = vshrl.u32 %v1843, 7
    %v1845 = vsub.s32 %v1842, %v1844
    %v1846 = vrot.slane %v1832, %v1845
    %v1847 = vlaneseq
    %v1848 = vshrl.u32 %v1847, 7
    %v1849 = vsub.s32 0, %v1848
    %v1850 = vrot.slane %v1839, %v1849
    %v1851 = vlaneseq
    %v1852 = vshrl.u32 %v1851, 7
    %v1853 = vsub.s32 0, %v1852
    %v1854 = vrot.slane %v1846, %v1853
    %1855 = vrot.lane.b32.xlu0 %v1850, 80
    %v1856 = vpop.permute.xlu0 %1855
    %1857 = vrot.lane.b32.xlu0 %v1854, 80
    %v1858 = vpop.permute.xlu0 %1857
    %1861 = vst.msk [vmem:[#allocation10 + $0x6] sm:$0x1] %vm414, %v1856
    %1862 = vst.msk [vmem:[#allocation10 + $0xe] sm:$0x1] %vm414, %v1858
    %v1863 = vsel %vm170, %v1721, 0
    %1865 = vmatprep.subr.mxu0 0.0
    %1866 = vmatpush1.msra.mxu0 0.0
    %1867 = vmatprep.subr.mxu0 0.0
    %1868 = vmatpush1.msra.mxu0 0.0
    %1869 = vmatprep.subr.mxu0 0.0
    %1870 = vmatpush1.msra.mxu0 0.0
    %1871 = vmatprep.subr.mxu0 0.0
    %1872 = vmatpush1.msra.mxu0 0.0
    %1873 = vmatprep.subr.mxu0 0.0
    %1874 = vmatpush1.msra.mxu0 0.0
    %1875 = vmatprep.subr.mxu0 0.0
    %1876 = vmatpush1.msra.mxu0 0.0
    %1877 = vmatprep.subr.mxu0 0.0
    %1878 = vmatpush1.msra.mxu0 0.0
    %1879 = vmatprep.subr.mxu0 0.0
    %1880 = vmatpush1.msra.mxu0 0.0
    %1881 = vmatprep.subr.mxu0 0.0
    %1882 = vmatpush1.msra.mxu0 0.0
    %1883 = vmatprep.subr.mxu0 0.0
    %1884 = vmatpush1.msra.mxu0 0.0
    %1885 = vmatprep.subr.mxu0 0.0
    %1886 = vmatpush1.msra.mxu0 0.0
    %1887 = vmatprep.subr.mxu0 0.0
    %1888 = vmatpush1.msra.mxu0 0.0
    %1889 = vmatprep.subr.mxu0 0.0
    %1890 = vmatpush1.msra.mxu0 0.0
    %1891 = vmatprep.subr.mxu0 0.0
    %1892 = vmatpush1.msra.mxu0 0.0
    %1893 = vmatprep.subr.mxu0 0.0
    %1894 = vmatpush1.msra.mxu0 %v164
    %1895 = vmatprep.subr.mxu0 0.0
    %1896 = vmatpush1.msra.mxu0 %v163
    %1897 = vmatprep.subr.mxu0 0.0
    %1898 = vmatpush2.msra.mxu0 0.0
    %1899 = vmatprep.subr.mxu0 0.0
    %1900 = vmatpush2.msra.mxu0 0.0
    %1901 = vmatprep.subr.mxu0 0.0
    %1902 = vmatpush2.msra.mxu0 0.0
    %1903 = vmatprep.subr.mxu0 0.0
    %1904 = vmatpush2.msra.mxu0 0.0
    %1905 = vmatprep.subr.mxu0 0.0
    %1906 = vmatpush2.msra.mxu0 0.0
    %1907 = vmatprep.subr.mxu0 0.0
    %1908 = vmatpush2.msra.mxu0 0.0
    %1909 = vmatprep.subr.mxu0 0.0
    %1910 = vmatpush2.msra.mxu0 0.0
    %1911 = vmatprep.subr.mxu0 0.0
    %1912 = vmatpush2.msra.mxu0 0.0
    %1913 = vmatprep.subr.mxu0 0.0
    %1914 = vmatpush2.msra.mxu0 0.0
    %1915 = vmatprep.subr.mxu0 0.0
    %1916 = vmatpush2.msra.mxu0 0.0
    %1917 = vmatprep.subr.mxu0 0.0
    %1918 = vmatpush2.msra.mxu0 0.0
    %1919 = vmatprep.subr.mxu0 0.0
    %1920 = vmatpush2.msra.mxu0 0.0
    %1921 = vmatprep.subr.mxu0 0.0
    %1922 = vmatpush2.msra.mxu0 0.0
    %1923 = vmatprep.subr.mxu0 0.0
    %1924 = vmatpush2.msra.mxu0 0.0
    %1925 = vmatprep.subr.mxu0 0.0
    %1926 = vmatpush2.msra.mxu0 0.0
    %1927 = vmatprep.subr.mxu0 0.0
    %1928 = vmatpush2.msra.mxu0 0.0
    %1929 = vmatprep.mubr.f32.mxu0 0.0
    %1930 = vmatmul.mubr.f32.gmra.mxu0 %v1863
    %v1931 = vpop.f32.mrf.mxu0
    %v1932 = vadd.f32 0.0, %v1931
    %v1933 = vpop.f32.mrf.mxu0
    %1934 = vdwg.mxu0
    %v1935 = vadd.f32 %v160, %v1932
    %v1936 = vsub.f32 0.0, %v1935
    %v1937 = vmul.f32 %v1936, 1.442695
    %v1938 = vpow.pop %v1937
    %v1939 = vadd.f32 %v1938, 1.0
    %v1940 = vrcp.pop %v1939
    %v1941 = vmul.f32 1.0, %v1940
    %v1942 = vtanh.pop %v1935
    %v1943 = vmul.f32 %v1941, %v1712
    %1945 = vrot.lane.b32.xlu0 %v1942, 96
    %v1946 = vpop.permute.xlu0 %1945
    %v1948 = vmul.f32 %v1941, %v1946
    %1950 = vrot.lane.b32.xlu0 %v1948, 16
    %v1951 = vpop.permute.xlu0 %1950
    %v1953 = vadd.f32 %v1943, %v1951
    %v1954 = vtanh.pop %v1953
    %1956 = vrot.lane.b32.xlu0 %v1954, 32
    %v1957 = vpop.permute.xlu0 %1956
    %v1959 = vmul.f32 %v1941, %v1957
    %1961 = vrot.lane.b32.xlu0 %v1959, 80
    %v1962 = vpop.permute.xlu0 %1961
    %1964 = vrot.lane.b32.xlu0 %v1823, 96
    %v1965 = vpop.permute.xlu0 %1964
    %v1967 = vsel %vm170, %v1962, %v1965
    %v1969 = vsel %vm89, %v1967, 0
    %1971 = vmatprep.subr.mxu0 0.0
    %1972 = vmatpush1.msra.mxu0 0.0
    %1973 = vmatprep.subr.mxu0 0.0
    %1974 = vmatpush1.msra.mxu0 0.0
    %1975 = vmatprep.subr.mxu0 0.0
    %1976 = vmatpush1.msra.mxu0 0.0
    %1977 = vmatprep.subr.mxu0 0.0
    %1978 = vmatpush1.msra.mxu0 0.0
    %1979 = vmatprep.subr.mxu0 0.0
    %1980 = vmatpush1.msra.mxu0 0.0
    %1981 = vmatprep.subr.mxu0 0.0
    %1982 = vmatpush1.msra.mxu0 0.0
    %1983 = vmatprep.subr.mxu0 0.0
    %1984 = vmatpush1.msra.mxu0 0.0
    %1985 = vmatprep.subr.mxu0 0.0
    %1986 = vmatpush1.msra.mxu0 0.0
    %1987 = vmatprep.subr.mxu0 0.0
    %1988 = vmatpush1.msra.mxu0 0.0
    %1989 = vmatprep.subr.mxu0 0.0
    %1990 = vmatpush1.msra.mxu0 0.0
    %1991 = vmatprep.subr.mxu0 0.0
    %1992 = vmatpush1.msra.mxu0 0.0
    %1993 = vmatprep.subr.mxu0 0.0
    %1994 = vmatpush1.msra.mxu0 0.0
    %1995 = vmatprep.subr.mxu0 0.0
    %1996 = vmatpush1.msra.mxu0 %v168
    %1997 = vmatprep.subr.mxu0 0.0
    %1998 = vmatpush1.msra.mxu0 %v167
    %1999 = vmatprep.subr.mxu0 0.0
    %2000 = vmatpush1.msra.mxu0 %v166
    %2001 = vmatprep.subr.mxu0 0.0
    %2002 = vmatpush1.msra.mxu0 %v165
    %2003 = vmatprep.subr.mxu0 0.0
    %2004 = vmatpush2.msra.mxu0 0.0
    %2005 = vmatprep.subr.mxu0 0.0
    %2006 = vmatpush2.msra.mxu0 0.0
    %2007 = vmatprep.subr.mxu0 0.0
    %2008 = vmatpush2.msra.mxu0 0.0
    %2009 = vmatprep.subr.mxu0 0.0
    %2010 = vmatpush2.msra.mxu0 0.0
    %2011 = vmatprep.subr.mxu0 0.0
    %2012 = vmatpush2.msra.mxu0 0.0
    %2013 = vmatprep.subr.mxu0 0.0
    %2014 = vmatpush2.msra.mxu0 0.0
    %2015 = vmatprep.subr.mxu0 0.0
    %2016 = vmatpush2.msra.mxu0 0.0
    %2017 = vmatprep.subr.mxu0 0.0
    %2018 = vmatpush2.msra.mxu0 0.0
    %2019 = vmatprep.subr.mxu0 0.0
    %2020 = vmatpush2.msra.mxu0 0.0
    %2021 = vmatprep.subr.mxu0 0.0
    %2022 = vmatpush2.msra.mxu0 0.0
    %2023 = vmatprep.subr.mxu0 0.0
    %2024 = vmatpush2.msra.mxu0 0.0
    %2025 = vmatprep.subr.mxu0 0.0
    %2026 = vmatpush2.msra.mxu0 0.0
    %2027 = vmatprep.subr.mxu0 0.0
    %2028 = vmatpush2.msra.mxu0 0.0
    %2029 = vmatprep.subr.mxu0 0.0
    %2030 = vmatpush2.msra.mxu0 0.0
    %2031 = vmatprep.subr.mxu0 0.0
    %2032 = vmatpush2.msra.mxu0 0.0
    %2033 = vmatprep.subr.mxu0 0.0
    %2034 = vmatpush2.msra.mxu0 0.0
    %2035 = vmatprep.mubr.f32.mxu0 0.0
    %2036 = vmatmul.mubr.f32.gmra.mxu0 %v1969
    %v2037 = vpop.f32.mrf.mxu0
    %v2038 = vadd.f32 %v278, %v2037
    %v2039 = vpop.f32.mrf.mxu0
    %2040 = vdwg.mxu0
    %v2041 = vsub.f32 0.0, %v2038
    %v2042 = vmul.f32 %v2041, 1.442695
    %v2043 = vpow.pop %v2042
    %v2044 = vadd.f32 %v2043, 1.0
    %v2045 = vrcp.pop %v2044
    %v2046 = vmul.f32 1.0, %v2045
    %v2047 = vtanh.pop %v2038
    %v2048 = vmul.f32 %v2046, %v1817
    %2050 = vrot.lane.b32.xlu0 %v2047, 96
    %v2051 = vpop.permute.xlu0 %2050
    %v2053 = vmul.f32 %v2046, %v2051
    %2055 = vrot.lane.b32.xlu0 %v2053, 16
    %v2056 = vpop.permute.xlu0 %2055
    %v2058 = vadd.f32 %v2048, %v2056
    %v2059 = vtanh.pop %v2058
    %2061 = vrot.lane.b32.xlu0 %v2059, 32
    %v2062 = vpop.permute.xlu0 %2061
    %v2064 = vmul.f32 %v2046, %v2062
    %v2067 = vunpack.c.l.s4 1966171168
    %v2068 = vunpack.c.0.s8 %v2067
    %v2069 = vlaneseq
    %v2070 = vshrl.u32 %v2069, 7
    %v2071 = vsub.s32 %v2068, %v2070
    %v2072 = vrot.slane %v2064, %v2071
    %v2073 = vcombine.high %v2072, %v2072
    %v2075 = vunpack.c.l.s4 1966171168
    %v2076 = vunpack.c.0.s8 %v2075
    %v2077 = vlaneseq
    %v2078 = vshrl.u32 %v2077, 7
    %v2079 = vsub.s32 %v2076, %v2078
    %v2080 = vrot.slane %v2072, %v2079
    %v2082 = vunpack.c.l.s4 1966171168
    %v2083 = vunpack.c.0.s8 %v2082
    %v2084 = vlaneseq
    %v2085 = vshrl.u32 %v2084, 7
    %v2086 = vsub.s32 %v2083, %v2085
    %v2087 = vrot.slane %v2073, %v2086
    %v2088 = vlaneseq
    %v2089 = vshrl.u32 %v2088, 7
    %v2090 = vsub.s32 0, %v2089
    %v2091 = vrot.slane %v2080, %v2090
    %v2092 = vlaneseq
    %v2093 = vshrl.u32 %v2092, 7
    %v2094 = vsub.s32 0, %v2093
    %v2095 = vrot.slane %v2087, %v2094
    %2096 = vrot.lane.b32.xlu0 %v2091, 80
    %v2097 = vpop.permute.xlu0 %2096
    %2098 = vrot.lane.b32.xlu0 %v2095, 80
    %v2099 = vpop.permute.xlu0 %2098
    %2102 = vst.msk [vmem:[#allocation10 + $0x7] sm:$0x1] %vm414, %v2097
    %2103 = vst.msk [vmem:[#allocation10 + $0xf] sm:$0x1] %vm414, %v2099
    // Predicated region
    $region42: #{decoder_forward_pallas.1} parent=1 // pred_check
      _
    $region43: #{decoder_forward_pallas.1} parent=1 // pred_check_branch
      %2105 = sbr.rel (0) target = $region45
    $region44: #{decoder_forward_pallas.1} parent=1 // pred_region
      %s2107 = ssub.s32 256, 256
      %2108 = vsyncadd [#allocation4], %s2107
      %s2109 = sshll.u32 [#allocation10], 4
      %s2110 = int_to_ptr.vmem [resolvable:$true] %s2109
      %2115 = dma.vmem_to_hbm [thread:$0]  %s2110, 256, %s6, [#allocation4], 128, 128, 8
    $region45: #{decoder_forward_pallas.1} parent=1 // pred_fallthru
      _
    // Predicated region
    $region46: #{decoder_forward_pallas.1} parent=1 // pred_check
      _
    $region47: #{decoder_forward_pallas.1} parent=1 // pred_check_branch
      %2117 = sbr.rel (0) target = $region49
    $region48: #{decoder_forward_pallas.1} parent=1 // pred_region
      %2118 = dma.done [#allocation4], 256
    $region49: #{decoder_forward_pallas.1} parent=1 // pred_fallthru
      _
    %2119 = vsyncpa [#allocation3], 1
    %2120 = vsyncpa [#allocation6], 1
    %2121 = vsyncpa [#allocation9], 1
    %2122 = vsyncpa [#allocation4], 1

</llo_original>
